<compile_context>
chip_gen: v5e
topology: v5e:2x2
jax: 0.10.0
libtpu: 0.0.40
codegen_flags: <defaults>
</compile_context>

<pallas_src>
import functools

import jax
import jax.numpy as jnp
from jax.experimental import pallas as pl
from jax.experimental.pallas import tpu as pltpu

LANE = 128          # TPU lane width: every channel dim is padded to a multiple
NEG_INF = -1e30     # bias padding so log_softmax ignores padded logit columns


# ---------------------------------------------------------------------------
# Fused Pallas kernel
# ---------------------------------------------------------------------------
def fused_gcn_kernel(x_ref, w1_ref, a_ref, w2_ref, b1_ref, b2_ref,
                     p_ref, wfc_ref, bfc_ref,            # inputs
                     out_ref,                            # output (G, Cpad)
                     h_ref, acc_ref, pooled_ref):        # VMEM scratch
    """Grid = (layer, row_tile, k_tile);  tm == tk so row tiles == k slots.

    h_ref[k]        holds (X @ W1)[k-tile]   -> RHS slots for layer 0
    h_ref[nk + i]   holds (h1 @ W2)[i-tile]  -> RHS slots for layer 1
    acc_ref accumulates A_tile @ RHS_tile over the k axis in f32.
    pooled_ref accumulates P_tile @ h2_tile over row tiles; the FC +
    log_softmax head runs at the very last grid step.
    """
    l = pl.program_id(0)          # layer index (0 or 1)
    i = pl.program_id(1)          # output row tile
    k = pl.program_id(2)          # reduction (source-node) tile
    nr = pl.num_programs(1)
    nk = pl.num_programs(2)
    tk = a_ref.shape[1]

    # ---- first grid step: zero the pooled accumulator -----------------------
    @pl.when((l == 0) & (i == 0) & (k == 0))
    def _init_pooled():
        pooled_ref[...] = jnp.zeros_like(pooled_ref)

    # ---- hoisted feature transform: slot k of the layer-0 RHS = X[k] @ W1.
    #      Computed once (during the first row tile) and reused for every row
    #      tile of layer 0; never written to HBM.
    @pl.when((l == 0) & (i == 0))
    def _feature_transform():
        xk = x_ref[pl.ds(pl.multiple_of(k * tk, tk), tk), :]
        xw = jnp.dot(xk, w1_ref[...], preferred_element_type=jnp.float32)
        h_ref[k] = xw.astype(h_ref.dtype)

    # ---- start of each reduction: zero the f32 accumulator ------------------
    @pl.when(k == 0)
    def _init_acc():
        acc_ref[...] = jnp.zeros_like(acc_ref)

    # ---- main MXU stream: acc += A_tile @ H_tile  (bf16 x bf16 -> f32) ------
    acc_ref[...] += jnp.dot(a_ref[...], h_ref[l * nk + k],
                            preferred_element_type=jnp.float32)

    # ---- end of the reduction for this row tile ------------------------------
    @pl.when(k == nk - 1)
    def _epilogue():
        @pl.when(l == 0)
        def _layer0():
            h1 = jnp.maximum(acc_ref[...] + b1_ref[...], 0.0)
            # pre-transform the layer-1 RHS once per row tile: slot nk+i = h1 @ W2
            hw2 = jnp.dot(h1, w2_ref[...], preferred_element_type=jnp.float32)
            h_ref[nk + i] = hw2.astype(h_ref.dtype)

        @pl.when(l == 1)
        def _layer1():
            h2 = jnp.maximum(acc_ref[...] + b2_ref[...], 0.0)
            # fused global mean pool (P rows already carry the 1/|graph| factor):
            pooled_ref[...] += jnp.dot(p_ref[...], h2,
                                       preferred_element_type=jnp.float32)

            # final head: FC + log_softmax, written exactly once.
            @pl.when(i == nr - 1)
            def _head():
                logits = jnp.dot(pooled_ref[...], wfc_ref[...],
                                 preferred_element_type=jnp.float32) + bfc_ref[...]
                m = jnp.max(logits, axis=1, keepdims=True)
                z = logits - m
                lse = jnp.log(jnp.sum(jnp.exp(z), axis=1, keepdims=True))
                out_ref[...] = z - lse


# ---------------------------------------------------------------------------
# Helpers
# ---------------------------------------------------------------------------
def _round_up(v, m):
    return ((v + m - 1) // m) * m


def _pad2d(a, rows, cols, fill=0.0):
    out = jnp.full((rows, cols), fill, a.dtype)
    return out.at[: a.shape[0], : a.shape[1]].set(a)


def _pick_tile(n_pad):
    for t in (512, 256, 128):
        if n_pad % t == 0:
            return t
    return LANE


def _resident_spec(shape):
    rank = len(shape)
    return pl.BlockSpec(shape, lambda *_: (0,) * rank)


def build_norm_adj(edge_index, num_nodes):
    """Dense D^{-1/2} (A + I) D^{-1/2} (PyG gcn_norm), A[target, source]."""
    src, dst = edge_index[0], edge_index[1]
    a = jnp.zeros((num_nodes, num_nodes), jnp.float32)
    a = a.at[dst, src].add(1.0)
    a = a + jnp.eye(num_nodes, dtype=jnp.float32)
    deg = jnp.sum(a, axis=1)
    dinv = 1.0 / jnp.sqrt(deg)
    return a * dinv[:, None] * dinv[None, :]


def build_pool_matrix(batch, num_graphs):
    """P[g, n] = 1/|graph g| if node n in graph g (global_mean_pool as matmul)."""
    onehot = (batch[None, :] == jnp.arange(num_graphs)[:, None]).astype(jnp.float32)
    counts = jnp.maximum(jnp.sum(onehot, axis=1, keepdims=True), 1.0)
    return onehot / counts


# ---------------------------------------------------------------------------
# Forward
# ---------------------------------------------------------------------------
@functools.partial(jax.jit, static_argnums=(4,))
def gcnet_forward(params, x, edge_index, batch, num_graphs):
    n, cin = x.shape
    hidden = params["w1"].shape[1]
    cout = params["w_fc"].shape[1]
    g = num_graphs

    # --- padded / lane-dense sizes ------------------------------------------
    n_pad = _round_up(n, LANE)
    cin_pad = _round_up(cin, LANE)
    h_pad = _round_up(hidden, LANE)
    c_pad = _round_up(cout, LANE)
    tm = tk = _pick_tile(n_pad)          # row tile == k tile (shared RHS slots)
    assert tm == tk and n_pad % tm == 0
    n_tiles = n_pad // tk
    grid = (2, n_pad // tm, n_tiles)     # (layer, row tiles, k tiles)

    # --- plain-JAX graph preprocessing (glue) --------------------------------
    a_hat = _pad2d(build_norm_adj(edge_index, n), n_pad, n_pad).astype(jnp.bfloat16)
    pool = _pad2d(build_pool_matrix(batch, g), g, n_pad)

    x_p = _pad2d(x, n_pad, cin_pad)
    w1_p = _pad2d(params["w1"], cin_pad, h_pad)
    b1_p = _pad2d(params["b1"], 1, h_pad)
    w2_p = _pad2d(params["w2"], h_pad, h_pad)
    b2_p = _pad2d(params["b2"], 1, h_pad)
    wfc_p = _pad2d(params["w_fc"], h_pad, c_pad)
    bfc_p = _pad2d(params["b_fc"], 1, c_pad, fill=NEG_INF)   # mask padded classes

    # --- VMEM footprint -> explicit scoped limit (v7x only has 64 MiB) ------
    vmem_bytes = (
        2 * tm * tk * 2                              # A tiles (double-buffered, bf16)
        + 2 * g * tm * 4                             # P tiles (double-buffered)
        + n_pad * cin_pad * 4                        # resident X
        + (cin_pad + h_pad + c_pad) * h_pad * 4      # W1, W2, W_fc
        + (2 * h_pad + c_pad + g * c_pad) * 4        # biases + output block
        + 2 * n_pad * h_pad * 2                      # h scratch (bf16, both layers)
        + (tm + g) * h_pad * 4                       # accumulator + pooled
    )
    vmem_limit = int(min(max(2 * vmem_bytes, 32 * 1024 * 1024), 48 * 1024 * 1024))

    in_specs = [
        _resident_spec((n_pad, cin_pad)),                     # X (resident, read once)
        _resident_spec((cin_pad, h_pad)),                     # W1
        pl.BlockSpec((tm, tk), lambda l, i, k: (i, k)),       # A_hat tile stream
        _resident_spec((h_pad, h_pad)),                       # W2
        _resident_spec((1, h_pad)),                           # b1
        _resident_spec((1, h_pad)),                           # b2
        # pooling columns: only advance the block during layer 1 (l*i), so
        # layer 0 never triggers fresh pool DMAs.
        pl.BlockSpec((g, tm), lambda l, i, k: (0, l * i)),
        _resident_spec((h_pad, c_pad)),                       # W_fc
        _resident_spec((1, c_pad)),                           # b_fc (padded cols -inf)
    ]
    out_specs = pl.BlockSpec((g, c_pad), lambda l, i, k: (0, 0))

    scratch_shapes = [
        pltpu.VMEM((2 * n_tiles, tk, h_pad), jnp.bfloat16),  # X@W1 / h1@W2 slots
        pltpu.VMEM((tm, h_pad), jnp.float32),                # row-tile accumulator
        pltpu.VMEM((g, h_pad), jnp.float32),                 # pooled accumulator
    ]

    logp_pad = pl.pallas_call(
        fused_gcn_kernel,
        out_shape=jax.ShapeDtypeStruct((g, c_pad), jnp.float32),
        grid_spec=pltpu.PrefetchScalarGridSpec(
            num_scalar_prefetch=0,
            grid=grid,
            in_specs=in_specs,
            out_specs=out_specs,
            scratch_shapes=scratch_shapes,
        ),
        compiler_params=pltpu.CompilerParams(
            # Layer dependency + pooled accumulation carry state across row
            # tiles -> every axis is sequential.
            dimension_semantics=("arbitrary", "arbitrary", "arbitrary"),
            vmem_limit_bytes=vmem_limit,
        ),
    )(x_p, w1_p, a_hat, w2_p, b1_p, b2_p, pool, wfc_p, bfc_p)

    return logp_pad[:, :cout], 1


# ---------------------------------------------------------------------------
# Parameter init + references
# ---------------------------------------------------------------------------
def init_params(key, in_channels, out_channels, hidden_channels):
    ks = jax.random.split(key, 4)

    def glorot(k, fan_in, fan_out):
        lim = jnp.sqrt(6.0 / (fan_in + fan_out))
        return jax.random.uniform(k, (fan_in, fan_out), jnp.float32, -lim, lim)

    return {
        "w1": glorot(ks[0], in_channels, hidden_channels),
        "b1": jnp.zeros((1, hidden_channels), jnp.float32),
        "w2": glorot(ks[1], hidden_channels, hidden_channels),
        "b2": jnp.zeros((1, hidden_channels), jnp.float32),
        "w_fc": glorot(ks[2], hidden_channels, out_channels),
        "b_fc": 0.01 * jax.random.normal(ks[3], (1, out_channels), jnp.float32),
    }


def gcnet_reference(params, x, edge_index, batch, num_graphs):
    """Exact fp32 semantics of the PyTorch module."""
    with jax.default_matmul_precision("float32"):
        a_hat = build_norm_adj(edge_index, x.shape[0])
        p = build_pool_matrix(batch, num_graphs)
        h = jnp.maximum(a_hat @ (x @ params["w1"]) + params["b1"], 0.0)
        h = jnp.maximum(a_hat @ (h @ params["w2"]) + params["b2"], 0.0)
        logits = (p @ h) @ params["w_fc"] + params["b_fc"]
        return jax.nn.log_softmax(logits, axis=1)


def gcnet_reference_matched(params, x, edge_index, batch, num_graphs):
    """Same math, mirroring the kernel's bf16 casts of A_hat and the
    transformed features (separates structural bugs from bf16 rounding)."""
    with jax.default_matmul_precision("float32"):
        a = build_norm_adj(edge_index, x.shape[0])
        a = a.astype(jnp.bfloat16).astype(jnp.float32)
        xw = (x @ params["w1"]).astype(jnp.bfloat16).astype(jnp.float32)
        h1 = jnp.maximum(a @ xw + params["b1"], 0.0)
        hw2 = (h1 @ params["w2"]).astype(jnp.bfloat16).astype(jnp.float32)
        h2 = jnp.maximum(a @ hw2 + params["b2"], 0.0)
        pooled = build_pool_matrix(batch, num_graphs) @ h2
        logits = pooled @ params["w_fc"] + params["b_fc"]
        return jax.nn.log_softmax(logits, axis=1)


# ---------------------------------------------------------------------------
if __name__ == "__main__":
    key = jax.random.PRNGKey(0)
    k_x, k_e1, k_e2, k_p = jax.random.split(key, 4)

    in_channels, hidden_channels, out_channels = 4, 32, 4
    num_nodes, num_edges, num_graphs = 16, 32, 2

    # Node features
    x = jax.random.normal(k_x, (num_nodes, in_channels), jnp.float32)
    # Random directed edges (source row 0, target row 1)
    src = jax.random.randint(k_e1, (num_edges,), 0, num_nodes)
    dst = jax.random.randint(k_e2, (num_edges,), 0, num_nodes)
    edge_index = jnp.stack([src, dst], axis=0)
    # First 8 nodes -> graph 0, last 8 nodes -> graph 1
    batch = jnp.concatenate([jnp.zeros(8, jnp.int32), jnp.ones(8, jnp.int32)])

    params = init_params(k_p, in_channels, out_channels, hidden_channels)

    logp, aux = gcnet_forward(params, x, edge_index, batch, num_graphs)
    logp = jax.block_until_ready(logp)

    ref_matched = gcnet_reference_matched(params, x, edge_index, batch, num_graphs)
    ref_fp32 = gcnet_reference(params, x, edge_index, batch, num_graphs)

    assert logp.shape == (num_graphs, out_channels)
    assert int(aux) == 1
    assert bool(jnp.all(jnp.isfinite(logp)))
    # check vs a reference that mirrors the kernel's bf16 casts (structure-tight)
    assert bool(jnp.allclose(logp, ref_matched, atol=1e-2, rtol=1e-2))
    # loose check vs exact fp32 module semantics (bf16 A_hat is a perf choice)
    assert bool(jnp.allclose(logp, ref_fp32, atol=5e-2, rtol=5e-2))

    print("KERNEL_OK")
</pallas_src>

<mosaic_0001>
module attributes {stable_mosaic.version = 11 : i64} {
  func.func @fused_gcn_kernel(%arg0: i32, %arg1: i32, %arg2: i32, %arg3: memref<128x128xf32, #tpu.memory_space<vmem>>, %arg4: memref<128x128xf32, #tpu.memory_space<vmem>>, %arg5: memref<128x128xbf16, #tpu.memory_space<vmem>>, %arg6: memref<128x128xf32, #tpu.memory_space<vmem>>, %arg7: memref<1x128xf32, #tpu.memory_space<vmem>>, %arg8: memref<1x128xf32, #tpu.memory_space<vmem>>, %arg9: memref<2x128xf32, #tpu.memory_space<vmem>>, %arg10: memref<128x128xf32, #tpu.memory_space<vmem>>, %arg11: memref<1x128xf32, #tpu.memory_space<vmem>>, %arg12: memref<2x128xf32, #tpu.memory_space<vmem>>, %arg13: memref<2x128x128xbf16, #tpu.memory_space<vmem>>, %arg14: memref<128x128xf32, #tpu.memory_space<vmem>>, %arg15: memref<2x128xf32, #tpu.memory_space<vmem>>) attributes {dimension_semantics = [#tpu.dimension_semantics<arbitrary>, #tpu.dimension_semantics<arbitrary>, #tpu.dimension_semantics<arbitrary>], iteration_bounds = array<i64: 2, 1, 1>, scalar_prefetch = 0 : i64, scratch_operands = 3 : i64, tpu.core_type = #tpu.core_type<tc>, window_params = [{pipeline_mode = #tpu.pipeline_mode<synchronous>, transform_indices = @transform_0, window_bounds = array<i64: 128, 128>}, {pipeline_mode = #tpu.pipeline_mode<synchronous>, transform_indices = @transform_1, window_bounds = array<i64: 128, 128>}, {transform_indices = @transform_2, window_bounds = array<i64: 128, 128>}, {pipeline_mode = #tpu.pipeline_mode<synchronous>, transform_indices = @transform_3, window_bounds = array<i64: 128, 128>}, {pipeline_mode = #tpu.pipeline_mode<synchronous>, transform_indices = @transform_4, window_bounds = array<i64: 1, 128>}, {pipeline_mode = #tpu.pipeline_mode<synchronous>, transform_indices = @transform_5, window_bounds = array<i64: 1, 128>}, {transform_indices = @transform_6, window_bounds = array<i64: 2, 128>}, {pipeline_mode = #tpu.pipeline_mode<synchronous>, transform_indices = @transform_7, window_bounds = array<i64: 128, 128>}, {pipeline_mode = #tpu.pipeline_mode<synchronous>, transform_indices = @transform_8, window_bounds = array<i64: 1, 128>}, {pipeline_mode = #tpu.pipeline_mode<synchronous>, transform_indices = @transform_9, window_bounds = array<i64: 2, 128>}]} {
    %c0_i32 = arith.constant 0 : i32
    %0 = arith.cmpi eq, %arg0, %c0_i32 : i32
    %c0_i32_0 = arith.constant 0 : i32
    %1 = arith.cmpi eq, %arg1, %c0_i32_0 : i32
    %2 = arith.andi %0, %1 : i1
    %c0_i32_1 = arith.constant 0 : i32
    %3 = arith.cmpi eq, %arg2, %c0_i32_1 : i32
    %4 = arith.andi %2, %3 : i1
    %5 = arith.extui %4 : i1 to i32
    %c0_i32_2 = arith.constant 0 : i32
    %6 = arith.cmpi ne, %5, %c0_i32_2 : i32
    scf.if %6 {
      %cst_17 = arith.constant 0.000000e+00 : f32
      %28 = vector.broadcast %cst_17 : f32 to vector<2x128xf32>
      %c0_18 = arith.constant 0 : index
      %c0_19 = arith.constant 0 : index
      %29 = vector.load %arg15[%c0_18, %c0_19] : memref<2x128xf32, #tpu.memory_space<vmem>>, vector<2x128xf32>
      tpu.vector_store %arg15[%c0_18, %c0_19], %28 {strides = array<i32>} : memref<2x128xf32, #tpu.memory_space<vmem>>, vector<2x128xf32>,
    } else {
    }
    %c0_i32_3 = arith.constant 0 : i32
    %7 = arith.cmpi eq, %arg0, %c0_i32_3 : i32
    %c0_i32_4 = arith.constant 0 : i32
    %8 = arith.cmpi eq, %arg1, %c0_i32_4 : i32
    %9 = arith.andi %7, %8 : i1
    %10 = arith.extui %9 : i1 to i32
    %c0_i32_5 = arith.constant 0 : i32
    %11 = arith.cmpi ne, %10, %c0_i32_5 : i32
    scf.if %11 {
      %c128_i32 = arith.constant 128 : i32
      %28 = arith.muli %arg2, %c128_i32 : i32
      %29 = tpu.assume_multiple %28, 128 : i32
      %30 = arith.index_cast %29 : i32 to index
      %c0_17 = arith.constant 0 : index
      %31 = vector.load %arg3[%30, %c0_17] : memref<128x128xf32, #tpu.memory_space<vmem>>, vector<128x128xf32>
      %c0_18 = arith.constant 0 : index
      %c0_19 = arith.constant 0 : index
      %32 = vector.load %arg4[%c0_18, %c0_19] : memref<128x128xf32, #tpu.memory_space<vmem>>, vector<128x128xf32>
      %cst_20 = arith.constant dense<0.000000e+00> : vector<128x128xf32>
      %33 = tpu.matmul %31, %32, %cst_20 {dimension_numbers = #tpu.dot_dimension_numbers<[1], [0], [0], [1], [0, 0, 1, 1], [], []>} : vector<128x128xf32>, vector<128x128xf32>, vector<128x128xf32> -> vector<128x128xf32>
      %34 = arith.truncf %33 : vector<128x128xf32> to vector<128x128xbf16>
      %35 = arith.index_cast %arg2 : i32 to index
      %c0_21 = arith.constant 0 : index
      %c0_22 = arith.constant 0 : index
      %36 = vector.load %arg13[%35, %c0_21, %c0_22] : memref<2x128x128xbf16, #tpu.memory_space<vmem>>, vector<1x128x128xbf16>
      %37 = vector.shape_cast %36 : vector<1x128x128xbf16> to vector<128x128xbf16>
      %38 = vector.shape_cast %34 : vector<128x128xbf16> to vector<1x128x128xbf16>
      tpu.vector_store %arg13[%35, %c0_21, %c0_22], %38 {strides = array<i32>} : memref<2x128x128xbf16, #tpu.memory_space<vmem>>, vector<1x128x128xbf16>,
    } else {
    }
    %c0_i32_6 = arith.constant 0 : i32
    %12 = arith.cmpi eq, %arg2, %c0_i32_6 : i32
    %13 = arith.extui %12 : i1 to i32
    %c0_i32_7 = arith.constant 0 : i32
    %14 = arith.cmpi ne, %13, %c0_i32_7 : i32
    scf.if %14 {
      %cst_17 = arith.constant 0.000000e+00 : f32
      %28 = vector.broadcast %cst_17 : f32 to vector<128x128xf32>
      %c0_18 = arith.constant 0 : index
      %c0_19 = arith.constant 0 : index
      %29 = vector.load %arg14[%c0_18, %c0_19] : memref<128x128xf32, #tpu.memory_space<vmem>>, vector<128x128xf32>
      tpu.vector_store %arg14[%c0_18, %c0_19], %28 {strides = array<i32>} : memref<128x128xf32, #tpu.memory_space<vmem>>, vector<128x128xf32>,
    } else {
    }
    %c0 = arith.constant 0 : index
    %c0_8 = arith.constant 0 : index
    %15 = vector.load %arg14[%c0, %c0_8] : memref<128x128xf32, #tpu.memory_space<vmem>>, vector<128x128xf32>
    %c0_9 = arith.constant 0 : index
    %c0_10 = arith.constant 0 : index
    %16 = vector.load %arg5[%c0_9, %c0_10] : memref<128x128xbf16, #tpu.memory_space<vmem>>, vector<128x128xbf16>
    %c1_i32 = arith.constant 1 : i32
    %17 = arith.muli %arg0, %c1_i32 : i32
    %18 = arith.addi %17, %arg2 : i32
    %19 = arith.index_cast %18 : i32 to index
    %c0_11 = arith.constant 0 : index
    %c0_12 = arith.constant 0 : index
    %20 = vector.load %arg13[%19, %c0_11, %c0_12] : memref<2x128x128xbf16, #tpu.memory_space<vmem>>, vector<1x128x128xbf16>
    %21 = vector.shape_cast %20 : vector<1x128x128xbf16> to vector<128x128xbf16>
    %cst = arith.constant dense<0.000000e+00> : vector<128x128xf32>
    %22 = tpu.matmul %16, %21, %cst {dimension_numbers = #tpu.dot_dimension_numbers<[1], [0], [0], [1], [0, 0, 1, 1], [], []>} : vector<128x128xbf16>, vector<128x128xbf16>, vector<128x128xf32> -> vector<128x128xf32>
    %23 = arith.addf %15, %22 : vector<128x128xf32>
    %c0_13 = arith.constant 0 : index
    %c0_14 = arith.constant 0 : index
    %24 = vector.load %arg14[%c0_13, %c0_14] : memref<128x128xf32, #tpu.memory_space<vmem>>, vector<128x128xf32>
    tpu.vector_store %arg14[%c0_13, %c0_14], %23 {strides = array<i32>} : memref<128x128xf32, #tpu.memory_space<vmem>>, vector<128x128xf32>,
    %c0_i32_15 = arith.constant 0 : i32
    %25 = arith.cmpi eq, %arg2, %c0_i32_15 : i32
    %26 = arith.extui %25 : i1 to i32
    %c0_i32_16 = arith.constant 0 : i32
    %27 = arith.cmpi ne, %26, %c0_i32_16 : i32
    scf.if %27 {
      %c0_i32_17 = arith.constant 0 : i32
      %28 = arith.cmpi eq, %arg0, %c0_i32_17 : i32
      %29 = arith.extui %28 : i1 to i32
      %c0_i32_18 = arith.constant 0 : i32
      %30 = arith.cmpi ne, %29, %c0_i32_18 : i32
      scf.if %30 {
        %c0_21 = arith.constant 0 : index
        %c0_22 = arith.constant 0 : index
        %34 = vector.load %arg14[%c0_21, %c0_22] : memref<128x128xf32, #tpu.memory_space<vmem>>, vector<128x128xf32>
        %c0_23 = arith.constant 0 : index
        %c0_24 = arith.constant 0 : index
        %35 = vector.load %arg7[%c0_23, %c0_24] : memref<1x128xf32, #tpu.memory_space<vmem>>, vector<1x128xf32>
        %36 = vector.broadcast %35 : vector<1x128xf32> to vector<128x128xf32>
        %37 = arith.addf %34, %36 : vector<128x128xf32>
        %cst_25 = arith.constant 0.000000e+00 : f32
        %38 = vector.broadcast %cst_25 : f32 to vector<128x128xf32>
        %39 = arith.maximumf %37, %38 : vector<128x128xf32>
        %c0_26 = arith.constant 0 : index
        %c0_27 = arith.constant 0 : index
        %40 = vector.load %arg6[%c0_26, %c0_27] : memref<128x128xf32, #tpu.memory_space<vmem>>, vector<128x128xf32>
        %cst_28 = arith.constant dense<0.000000e+00> : vector<128x128xf32>
        %41 = tpu.matmul %39, %40, %cst_28 {dimension_numbers = #tpu.dot_dimension_numbers<[1], [0], [0], [1], [0, 0, 1, 1], [], []>} : vector<128x128xf32>, vector<128x128xf32>, vector<128x128xf32> -> vector<128x128xf32>
        %42 = arith.truncf %41 : vector<128x128xf32> to vector<128x128xbf16>
        %c1_i32_29 = arith.constant 1 : i32
        %43 = arith.addi %c1_i32_29, %arg1 : i32
        %44 = arith.index_cast %43 : i32 to index
        %c0_30 = arith.constant 0 : index
        %c0_31 = arith.constant 0 : index
        %45 = vector.load %arg13[%44, %c0_30, %c0_31] : memref<2x128x128xbf16, #tpu.memory_space<vmem>>, vector<1x128x128xbf16>
        %46 = vector.shape_cast %45 : vector<1x128x128xbf16> to vector<128x128xbf16>
        %47 = vector.shape_cast %42 : vector<128x128xbf16> to vector<1x128x128xbf16>
        tpu.vector_store %arg13[%44, %c0_30, %c0_31], %47 {strides = array<i32>} : memref<2x128x128xbf16, #tpu.memory_space<vmem>>, vector<1x128x128xbf16>,
      } else {
      }
      %c1_i32_19 = arith.constant 1 : i32
      %31 = arith.cmpi eq, %arg0, %c1_i32_19 : i32
      %32 = arith.extui %31 : i1 to i32
      %c0_i32_20 = arith.constant 0 : i32
      %33 = arith.cmpi ne, %32, %c0_i32_20 : i32
      scf.if %33 {
        %c0_21 = arith.constant 0 : index
        %c0_22 = arith.constant 0 : index
        %34 = vector.load %arg14[%c0_21, %c0_22] : memref<128x128xf32, #tpu.memory_space<vmem>>, vector<128x128xf32>
        %c0_23 = arith.constant 0 : index
        %c0_24 = arith.constant 0 : index
        %35 = vector.load %arg8[%c0_23, %c0_24] : memref<1x128xf32, #tpu.memory_space<vmem>>, vector<1x128xf32>
        %36 = vector.broadcast %35 : vector<1x128xf32> to vector<128x128xf32>
        %37 = arith.addf %34, %36 : vector<128x128xf32>
        %cst_25 = arith.constant 0.000000e+00 : f32
        %38 = vector.broadcast %cst_25 : f32 to vector<128x128xf32>
        %39 = arith.maximumf %37, %38 : vector<128x128xf32>
        %c0_26 = arith.constant 0 : index
        %c0_27 = arith.constant 0 : index
        %40 = vector.load %arg15[%c0_26, %c0_27] : memref<2x128xf32, #tpu.memory_space<vmem>>, vector<2x128xf32>
        %c0_28 = arith.constant 0 : index
        %c0_29 = arith.constant 0 : index
        %41 = vector.load %arg9[%c0_28, %c0_29] : memref<2x128xf32, #tpu.memory_space<vmem>>, vector<2x128xf32>
        %cst_30 = arith.constant dense<0.000000e+00> : vector<2x128xf32>
        %42 = tpu.matmul %41, %39, %cst_30 {dimension_numbers = #tpu.dot_dimension_numbers<[1], [0], [0], [1], [0, 0, 1, 1], [], []>} : vector<2x128xf32>, vector<128x128xf32>, vector<2x128xf32> -> vector<2x128xf32>
        %43 = arith.addf %40, %42 : vector<2x128xf32>
        %c0_31 = arith.constant 0 : index
        %c0_32 = arith.constant 0 : index
        %44 = vector.load %arg15[%c0_31, %c0_32] : memref<2x128xf32, #tpu.memory_space<vmem>>, vector<2x128xf32>
        tpu.vector_store %arg15[%c0_31, %c0_32], %43 {strides = array<i32>} : memref<2x128xf32, #tpu.memory_space<vmem>>, vector<2x128xf32>,
        %c0_i32_33 = arith.constant 0 : i32
        %45 = arith.cmpi eq, %arg1, %c0_i32_33 : i32
        %46 = arith.extui %45 : i1 to i32
        %c0_i32_34 = arith.constant 0 : i32
        %47 = arith.cmpi ne, %46, %c0_i32_34 : i32
        scf.if %47 {
          %c0_35 = arith.constant 0 : index
          %c0_36 = arith.constant 0 : index
          %48 = vector.load %arg15[%c0_35, %c0_36] : memref<2x128xf32, #tpu.memory_space<vmem>>, vector<2x128xf32>
          %c0_37 = arith.constant 0 : index
          %c0_38 = arith.constant 0 : index
          %49 = vector.load %arg10[%c0_37, %c0_38] : memref<128x128xf32, #tpu.memory_space<vmem>>, vector<128x128xf32>
          %cst_39 = arith.constant dense<0.000000e+00> : vector<2x128xf32>
          %50 = tpu.matmul %48, %49, %cst_39 {dimension_numbers = #tpu.dot_dimension_numbers<[1], [0], [0], [1], [0, 0, 1, 1], [], []>} : vector<2x128xf32>, vector<128x128xf32>, vector<2x128xf32> -> vector<2x128xf32>
          %c0_40 = arith.constant 0 : index
          %c0_41 = arith.constant 0 : index
          %51 = vector.load %arg11[%c0_40, %c0_41] : memref<1x128xf32, #tpu.memory_space<vmem>>, vector<1x128xf32>
          %52 = vector.broadcast %51 : vector<1x128xf32> to vector<2x128xf32>
          %53 = arith.addf %50, %52 : vector<2x128xf32>
          %cst_42 = arith.constant dense<0xFF800000> : vector<2xf32>
          %54 = vector.multi_reduction <maximumf>, %53, %cst_42 [1] : vector<2x128xf32> to vector<2xf32>
          %55 = vector.shape_cast %54 : vector<2xf32> to vector<2x1xf32>
          %56 = vector.broadcast %55 : vector<2x1xf32> to vector<2x128xf32>
          %57 = arith.subf %53, %56 : vector<2x128xf32>
          %58 = math.exp %57 : vector<2x128xf32>
          %cst_43 = arith.constant dense<0.000000e+00> : vector<2xf32>
          %59 = vector.multi_reduction <add>, %58, %cst_43 [1] : vector<2x128xf32> to vector<2xf32>
          %60 = vector.shape_cast %59 : vector<2xf32> to vector<2x1xf32>
          %61 = math.log %60 : vector<2x1xf32>
          %62 = vector.broadcast %61 : vector<2x1xf32> to vector<2x128xf32>
          %63 = arith.subf %57, %62 : vector<2x128xf32>
          %c0_44 = arith.constant 0 : index
          %c0_45 = arith.constant 0 : index
          %64 = vector.load %arg12[%c0_44, %c0_45] : memref<2x128xf32, #tpu.memory_space<vmem>>, vector<2x128xf32>
          tpu.vector_store %arg12[%c0_44, %c0_45], %63 {strides = array<i32>} : memref<2x128xf32, #tpu.memory_space<vmem>>, vector<2x128xf32>,
        } else {
        }
      } else {
      }
    } else {
    }
    return
  }
  func.func @transform_0(%arg0: i32, %arg1: i32, %arg2: i32) -> (i32, i32) {
    %c0_i32 = arith.constant 0 : i32
    %c0_i32_0 = arith.constant 0 : i32
    %c0_i32_1 = arith.constant 0 : i32
    return %c0_i32, %c0_i32_0 : i32, i32
  }
  func.func @transform_1(%arg0: i32, %arg1: i32, %arg2: i32) -> (i32, i32) {
    %c0_i32 = arith.constant 0 : i32
    %c0_i32_0 = arith.constant 0 : i32
    %c0_i32_1 = arith.constant 0 : i32
    return %c0_i32, %c0_i32_0 : i32, i32
  }
  func.func @transform_2(%arg0: i32, %arg1: i32, %arg2: i32) -> (i32, i32) {
    %c0_i32 = arith.constant 0 : i32
    return %arg1, %arg2 : i32, i32
  }
  func.func @transform_3(%arg0: i32, %arg1: i32, %arg2: i32) -> (i32, i32) {
    %c0_i32 = arith.constant 0 : i32
    %c0_i32_0 = arith.constant 0 : i32
    %c0_i32_1 = arith.constant 0 : i32
    return %c0_i32, %c0_i32_0 : i32, i32
  }
  func.func @transform_4(%arg0: i32, %arg1: i32, %arg2: i32) -> (i32, i32) {
    %c0_i32 = arith.constant 0 : i32
    %c0_i32_0 = arith.constant 0 : i32
    %c0_i32_1 = arith.constant 0 : i32
    return %c0_i32, %c0_i32_0 : i32, i32
  }
  func.func @transform_5(%arg0: i32, %arg1: i32, %arg2: i32) -> (i32, i32) {
    %c0_i32 = arith.constant 0 : i32
    %c0_i32_0 = arith.constant 0 : i32
    %c0_i32_1 = arith.constant 0 : i32
    return %c0_i32, %c0_i32_0 : i32, i32
  }
  func.func @transform_6(%arg0: i32, %arg1: i32, %arg2: i32) -> (i32, i32) {
    %0 = arith.muli %arg0, %arg1 : i32
    %c0_i32 = arith.constant 0 : i32
    %c0_i32_0 = arith.constant 0 : i32
    return %c0_i32, %0 : i32, i32
  }
  func.func @transform_7(%arg0: i32, %arg1: i32, %arg2: i32) -> (i32, i32) {
    %c0_i32 = arith.constant 0 : i32
    %c0_i32_0 = arith.constant 0 : i32
    %c0_i32_1 = arith.constant 0 : i32
    return %c0_i32, %c0_i32_0 : i32, i32
  }
  func.func @transform_8(%arg0: i32, %arg1: i32, %arg2: i32) -> (i32, i32) {
    %c0_i32 = arith.constant 0 : i32
    %c0_i32_0 = arith.constant 0 : i32
    %c0_i32_1 = arith.constant 0 : i32
    return %c0_i32, %c0_i32_0 : i32, i32
  }
  func.func @transform_9(%arg0: i32, %arg1: i32, %arg2: i32) -> (i32, i32) {
    %c0_i32 = arith.constant 0 : i32
    %c0_i32_0 = arith.constant 0 : i32
    %c0_i32_1 = arith.constant 0 : i32
    return %c0_i32, %c0_i32_0 : i32, i32
  }
}

</mosaic_0001>

<llo_original>
// kernel: gcnet_forward.1
$region0: #{gcnet_forward.1}
  #allocation0 [shape = 'u32[]', space=smem, size = 0x4, offset = 0x4, fixed_abs, tag = 'smem constant byte address 0x4 - core index']
  #allocation1 [shape = 'u32[72,128]{1,0:T(1,128)}', space=vmem, size = 0x9000, scoped, tag = 'internal scratch']
  #allocation2 [shape = 'bf16[2,128,128]{2,1,0:T(8,128)(2,1)}', space=vmem, size = 0x10000, scoped, tag = 'scratch operand']
  #allocation3 [shape = 'f32[128,128]{1,0:T(8,128)}', space=vmem, size = 0x10000, scoped, tag = 'scratch operand']
  #allocation4 [shape = 'f32[2,128]{1,0:T(2,128)}', space=vmem, size = 0x400, scoped, tag = 'scratch operand']
  %s0 = inlined_call_operand.vmem [shape: f32[128,128], index: 0, kind: input, shape index: {}]
  %s1 = inlined_call_operand.vmem [shape: f32[128,128], index: 1, kind: input, shape index: {}]
  %s2 = inlined_call_operand.vmem [shape: bf16[128,128], index: 2, kind: input, shape index: {}]
  %s3 = inlined_call_operand.vmem [shape: f32[128,128], index: 3, kind: input, shape index: {}]
  %s4 = inlined_call_operand.vmem [shape: f32[1,128], index: 4, kind: input, shape index: {}]
  %s5 = inlined_call_operand.vmem [shape: f32[1,128], index: 5, kind: input, shape index: {}]
  %s6 = inlined_call_operand.vmem [shape: f32[2,128], index: 6, kind: input, shape index: {}]
  %s7 = inlined_call_operand.vmem [shape: f32[128,128], index: 7, kind: input, shape index: {}]
  %s8 = inlined_call_operand.vmem [shape: f32[1,128], index: 8, kind: input, shape index: {}]
  %s9 = inlined_call_operand.hbm [shape: f32[2,128], index: 9, kind: output, shape index: {}]
  %s10 = sld [smem:[#allocation0]]
  $region97: #{gcnet_forward.1} parent=0
    _
  %s12 = ssub.s32 1, %s10
  %s13 = scalar_select 0, %s12, %s10
  $region1: #{gcnet_forward.1} parent=0
    #allocation5 [shape = 'u8[1024]{0}', space=vmem, size = 0x400, scoped, tag = 'output window, operand 0, single buffered']
    #allocation6 [shape = 's32[2]{0}', space=sflag, size = 0x8, scoped, tag = 'scoped memory for gcnet_forward.1']
    %14 = vsyncpa [#allocation6], 0
    loop: start=0, step=1, limit=4
    $region2: #{gcnet_forward.1} parent=1 // loop_pre_header
      _
    $region3: #{gcnet_forward.1} parent=1 // loop_header
      %s16 = sphi 0, %s20
      %p17 = scmp.ge.s32.totalorder %s16, 4
      %s23 = sphi 0, %s42
      %s24 = sphi 0, %s38
      %s25 = sphi 0, %s34
      %s26 = sphi 0, %s23
      %s27 = sphi 0, %s24
      %s28 = sphi 0, %s25
      %s29 = sphi 0, %s26
      %s30 = sphi 0, %s27
      %s31 = sphi 0, %s28
      %s43 = sphi 0, %s43
      %s45 = sphi 0, %s43
      %s46 = sphi 0, %s45
      %s60 = sphi 0, %s46
      %s64 = sphi 0, %s64
      %s66 = sphi 0, %s64
      %s67 = sphi 0, %s66
      %s81 = sphi 0, %s67
      %s89 = sphi 0, %s91
      %s92 = sphi 0, %s89
      %s93 = sphi 0, %s92
      %s109 = sphi 0, %s93
      %s113 = sphi 0, %s113
      %s115 = sphi 0, %s113
      %s116 = sphi 0, %s115
      %s130 = sphi 0, %s116
      %s134 = sphi 0, %s134
      %s136 = sphi 0, %s134
      %s137 = sphi 0, %s136
      %s151 = sphi 0, %s137
      %s155 = sphi 0, %s155
      %s157 = sphi 0, %s155
      %s158 = sphi 0, %s157
      %s172 = sphi 0, %s158
      %s180 = sphi 0, %s182
      %s183 = sphi 0, %s180
      %s184 = sphi 0, %s183
      %s200 = sphi 0, %s184
      %s204 = sphi 0, %s204
      %s206 = sphi 0, %s204
      %s207 = sphi 0, %s206
      %s221 = sphi 0, %s207
      %s225 = sphi 0, %s225
      %s227 = sphi 0, %s225
      %s228 = sphi 0, %s227
      %s242 = sphi 0, %s228
      %s246 = sphi 0, %s246
      %s248 = sphi 0, %s246
      %s249 = sphi 0, %s248
      %s263 = sphi 0, %s249
    $region4: #{gcnet_forward.1} parent=1 // loop_header_branch
      %19 = sbr.rel (%p17) target = $region8
    $region5: #{gcnet_forward.1} parent=1 // loop_body
      %s21 = ssub.s32 %s16, 1
      %s22 = ssub.s32 %s16, 2
      %s32 = sadd.s32 1, %s25
      %p33 = scmp.ge.s32.totalorder %s32, 1
      %s34 = scalar_select %p33, 0, %s32
      %s35 = sadd.s32 1, %s24
      %s36 = scalar_select %p33, %s35, %s24
      %p37 = scmp.ge.s32.totalorder %s36, 1
      %s38 = scalar_select %p37, 0, %s36
      %s39 = sadd.s32 1, %s23
      %s40 = scalar_select %p37, %s39, %s23
      %p41 = scmp.ge.s32.totalorder %s40, 2
      %s42 = scalar_select %p41, 0, %s40
      %s44 = sadd.s32 %s43, 1
      %p47 = scmp.eq.s32.totalorder %s16, 1
      %p48 = scmp.ne.s32.totalorder %s43, %s45
      %p49 = scmp.eq.s32.totalorder %s16, 0
      %p50 = por %p48, %p49
      %p51 = scmp.ne.s32.totalorder %s43, %s45
      %p52 = scmp.eq.s32.totalorder %s21, 1
      %p53 = por %p51, %p52
      %p54 = scmp.ne.s32.totalorder %s45, %s46
      %p55 = scmp.eq.s32.totalorder %s21, 0
      %p56 = por %p54, %p55
      %p57 = scmp.ne.s32.totalorder %s45, %s46
      %p58 = scmp.eq.s32.totalorder %s22, 1
      %p59 = por %p57, %p58
      %p61 = scmp.ne.s32.totalorder %s46, %s60
      %p62 = scmp.eq.s32.totalorder %s22, 0
      %p63 = por %p61, %p62
      %s65 = sadd.s32 %s64, 1
      %p68 = scmp.eq.s32.totalorder %s16, 1
      %p69 = scmp.ne.s32.totalorder %s64, %s66
      %p70 = scmp.eq.s32.totalorder %s16, 0
      %p71 = por %p69, %p70
      %p72 = scmp.ne.s32.totalorder %s64, %s66
      %p73 = scmp.eq.s32.totalorder %s21, 1
      %p74 = por %p72, %p73
      %p75 = scmp.ne.s32.totalorder %s66, %s67
      %p76 = scmp.eq.s32.totalorder %s21, 0
      %p77 = por %p75, %p76
      %p78 = scmp.ne.s32.totalorder %s66, %s67
      %p79 = scmp.eq.s32.totalorder %s22, 1
      %p80 = por %p78, %p79
      %p82 = scmp.ne.s32.totalorder %s67, %s81
      %p83 = scmp.eq.s32.totalorder %s22, 0
      %p84 = por %p82, %p83
      %s85 = ssub.s32 %s24, %s38
      %s86 = ssub.s32 %s25, %s34
      %s87 = sor.u32 %s85, %s86
      %p88 = scmp.eq.s32.totalorder %s87, 0
      %s90 = sadd.s32 %s89, 1
      %s91 = scalar_select %p88, %s89, %s90
      %p94 = pneg %p88
      %p95 = scmp.eq.s32.totalorder %s16, 1
      %p96 = por %p94, %p95
      %p97 = scmp.ne.s32.totalorder %s89, %s92
      %p98 = scmp.eq.s32.totalorder %s16, 0
      %p99 = por %p97, %p98
      %p100 = scmp.ne.s32.totalorder %s89, %s92
      %p101 = scmp.eq.s32.totalorder %s21, 1
      %p102 = por %p100, %p101
      %p103 = scmp.ne.s32.totalorder %s92, %s93
      %p104 = scmp.eq.s32.totalorder %s21, 0
      %p105 = por %p103, %p104
      %p106 = scmp.ne.s32.totalorder %s92, %s93
      %p107 = scmp.eq.s32.totalorder %s22, 1
      %p108 = por %p106, %p107
      %p110 = scmp.ne.s32.totalorder %s93, %s109
      %p111 = scmp.eq.s32.totalorder %s22, 0
      %p112 = por %p110, %p111
      %s114 = sadd.s32 %s113, 1
      %p117 = scmp.eq.s32.totalorder %s16, 1
      %p118 = scmp.ne.s32.totalorder %s113, %s115
      %p119 = scmp.eq.s32.totalorder %s16, 0
      %p120 = por %p118, %p119
      %p121 = scmp.ne.s32.totalorder %s113, %s115
      %p122 = scmp.eq.s32.totalorder %s21, 1
      %p123 = por %p121, %p122
      %p124 = scmp.ne.s32.totalorder %s115, %s116
      %p125 = scmp.eq.s32.totalorder %s21, 0
      %p126 = por %p124, %p125
      %p127 = scmp.ne.s32.totalorder %s115, %s116
      %p128 = scmp.eq.s32.totalorder %s22, 1
      %p129 = por %p127, %p128
      %p131 = scmp.ne.s32.totalorder %s116, %s130
      %p132 = scmp.eq.s32.totalorder %s22, 0
      %p133 = por %p131, %p132
      %s135 = sadd.s32 %s134, 1
      %p138 = scmp.eq.s32.totalorder %s16, 1
      %p139 = scmp.ne.s32.totalorder %s134, %s136
      %p140 = scmp.eq.s32.totalorder %s16, 0
      %p141 = por %p139, %p140
      %p142 = scmp.ne.s32.totalorder %s134, %s136
      %p143 = scmp.eq.s32.totalorder %s21, 1
      %p144 = por %p142, %p143
      %p145 = scmp.ne.s32.totalorder %s136, %s137
      %p146 = scmp.eq.s32.totalorder %s21, 0
      %p147 = por %p145, %p146
      %p148 = scmp.ne.s32.totalorder %s136, %s137
      %p149 = scmp.eq.s32.totalorder %s22, 1
      %p150 = por %p148, %p149
      %p152 = scmp.ne.s32.totalorder %s137, %s151
      %p153 = scmp.eq.s32.totalorder %s22, 0
      %p154 = por %p152, %p153
      %s156 = sadd.s32 %s155, 1
      %p159 = scmp.eq.s32.totalorder %s16, 1
      %p160 = scmp.ne.s32.totalorder %s155, %s157
      %p161 = scmp.eq.s32.totalorder %s16, 0
      %p162 = por %p160, %p161
      %p163 = scmp.ne.s32.totalorder %s155, %s157
      %p164 = scmp.eq.s32.totalorder %s21, 1
      %p165 = por %p163, %p164
      %p166 = scmp.ne.s32.totalorder %s157, %s158
      %p167 = scmp.eq.s32.totalorder %s21, 0
      %p168 = por %p166, %p167
      %p169 = scmp.ne.s32.totalorder %s157, %s158
      %p170 = scmp.eq.s32.totalorder %s22, 1
      %p171 = por %p169, %p170
      %p173 = scmp.ne.s32.totalorder %s158, %s172
      %p174 = scmp.eq.s32.totalorder %s22, 0
      %p175 = por %p173, %p174
      %s176 = smul.u32 %s23, %s24
      %s177 = smul.u32 %s42, %s38
      %s178 = ssub.s32 %s176, %s177
      %p179 = scmp.eq.s32.totalorder %s178, 0
      %s181 = sadd.s32 %s180, 1
      %s182 = scalar_select %p179, %s180, %s181
      %p185 = pneg %p179
      %p186 = scmp.eq.s32.totalorder %s16, 1
      %p187 = por %p185, %p186
      %p188 = scmp.ne.s32.totalorder %s180, %s183
      %p189 = scmp.eq.s32.totalorder %s16, 0
      %p190 = por %p188, %p189
      %p191 = scmp.ne.s32.totalorder %s180, %s183
      %p192 = scmp.eq.s32.totalorder %s21, 1
      %p193 = por %p191, %p192
      %p194 = scmp.ne.s32.totalorder %s183, %s184
      %p195 = scmp.eq.s32.totalorder %s21, 0
      %p196 = por %p194, %p195
      %p197 = scmp.ne.s32.totalorder %s183, %s184
      %p198 = scmp.eq.s32.totalorder %s22, 1
      %p199 = por %p197, %p198
      %p201 = scmp.ne.s32.totalorder %s184, %s200
      %p202 = scmp.eq.s32.totalorder %s22, 0
      %p203 = por %p201, %p202
      %s205 = sadd.s32 %s204, 1
      %p208 = scmp.eq.s32.totalorder %s16, 1
      %p209 = scmp.ne.s32.totalorder %s204, %s206
      %p210 = scmp.eq.s32.totalorder %s16, 0
      %p211 = por %p209, %p210
      %p212 = scmp.ne.s32.totalorder %s204, %s206
      %p213 = scmp.eq.s32.totalorder %s21, 1
      %p214 = por %p212, %p213
      %p215 = scmp.ne.s32.totalorder %s206, %s207
      %p216 = scmp.eq.s32.totalorder %s21, 0
      %p217 = por %p215, %p216
      %p218 = scmp.ne.s32.totalorder %s206, %s207
      %p219 = scmp.eq.s32.totalorder %s22, 1
      %p220 = por %p218, %p219
      %p222 = scmp.ne.s32.totalorder %s207, %s221
      %p223 = scmp.eq.s32.totalorder %s22, 0
      %p224 = por %p222, %p223
      %s226 = sadd.s32 %s225, 1
      %p229 = scmp.eq.s32.totalorder %s16, 1
      %p230 = scmp.ne.s32.totalorder %s225, %s227
      %p231 = scmp.eq.s32.totalorder %s16, 0
      %p232 = por %p230, %p231
      %p233 = scmp.ne.s32.totalorder %s225, %s227
      %p234 = scmp.eq.s32.totalorder %s21, 1
      %p235 = por %p233, %p234
      %p236 = scmp.ne.s32.totalorder %s227, %s228
      %p237 = scmp.eq.s32.totalorder %s21, 0
      %p238 = por %p236, %p237
      %p239 = scmp.ne.s32.totalorder %s227, %s228
      %p240 = scmp.eq.s32.totalorder %s22, 1
      %p241 = por %p239, %p240
      %p243 = scmp.ne.s32.totalorder %s228, %s242
      %p244 = scmp.eq.s32.totalorder %s22, 0
      %p245 = por %p243, %p244
      %s247 = sadd.s32 %s246, 1
      %p250 = scmp.eq.s32.totalorder %s16, 1
      %p251 = scmp.ne.s32.totalorder %s246, %s248
      %p252 = scmp.eq.s32.totalorder %s16, 0
      %p253 = por %p251, %p252
      %p254 = scmp.ne.s32.totalorder %s246, %s248
      %p255 = scmp.eq.s32.totalorder %s21, 1
      %p256 = por %p254, %p255
      %p257 = scmp.ne.s32.totalorder %s248, %s249
      %p258 = scmp.eq.s32.totalorder %s21, 0
      %p259 = por %p257, %p258
      %p260 = scmp.ne.s32.totalorder %s248, %s249
      %p261 = scmp.eq.s32.totalorder %s22, 1
      %p262 = por %p260, %p261
      %p264 = scmp.ne.s32.totalorder %s249, %s263
      %p265 = scmp.eq.s32.totalorder %s22, 0
      %p266 = por %p264, %p265
      %p267 = scmp.le.s32.totalorder 1, %s16
      %p268 = scmp.lt.s32.totalorder %s16, 3
      %p269 = pnand %p267, %p268
      %p270 = pneg %p269
      // Predicated region
      $region9: #{gcnet_forward.1} parent=5 // pred_check
        _
      $region10: #{gcnet_forward.1} parent=5 // pred_check_branch
        %272 = sbr.rel (%p269) target = $region12
      $region11: #{gcnet_forward.1} parent=5 // pred_region
        %s273 = ssub.s32 %s16, 1
        // Predicated region
        $region13: #{gcnet_forward.1} parent=11 // pred_check
          %p274 = pneg %p56
        $region14: #{gcnet_forward.1} parent=11 // pred_check_branch
          %276 = sbr.rel (%p274) target = $region16
        $region15: #{gcnet_forward.1} parent=11 // pred_region
          _
        $region16: #{gcnet_forward.1} parent=11 // pred_fallthru
          _
        // Predicated region
        $region17: #{gcnet_forward.1} parent=11 // pred_check
          %p277 = pneg %p77
        $region18: #{gcnet_forward.1} parent=11 // pred_check_branch
          %279 = sbr.rel (%p277) target = $region20
        $region19: #{gcnet_forward.1} parent=11 // pred_region
          _
        $region20: #{gcnet_forward.1} parent=11 // pred_fallthru
          _
        // Predicated region
        $region21: #{gcnet_forward.1} parent=11 // pred_check
          %p280 = pneg %p105
        $region22: #{gcnet_forward.1} parent=11 // pred_check_branch
          %282 = sbr.rel (%p280) target = $region24
        $region23: #{gcnet_forward.1} parent=11 // pred_region
          %s283 = smul.u32 16, %s27
          %p284 = scmp.lt.s32.totalorder %s283, 15
          %s285 = scalar_select %p284, %s283, 15
          %p286 = scmp.lt.s32.totalorder %s28, 0
          %s287 = scalar_select %p286, %s28, 0
          %s288 = sadd.s32 %s287, %s285
          %s289 = smul.addr %s288, 4
          %s290 = scalar_lea.vmem %s2, %s289
          %s291 = smul.u32 16, %s27
        $region24: #{gcnet_forward.1} parent=11 // pred_fallthru
          _
        // Predicated region
        $region25: #{gcnet_forward.1} parent=11 // pred_check
          %p292 = pneg %p126
        $region26: #{gcnet_forward.1} parent=11 // pred_check_branch
          %294 = sbr.rel (%p292) target = $region28
        $region27: #{gcnet_forward.1} parent=11 // pred_region
          _
        $region28: #{gcnet_forward.1} parent=11 // pred_fallthru
          _
        // Predicated region
        $region29: #{gcnet_forward.1} parent=11 // pred_check
          %p295 = pneg %p147
        $region30: #{gcnet_forward.1} parent=11 // pred_check_branch
          %297 = sbr.rel (%p295) target = $region32
        $region31: #{gcnet_forward.1} parent=11 // pred_region
          _
        $region32: #{gcnet_forward.1} parent=11 // pred_fallthru
          _
        // Predicated region
        $region33: #{gcnet_forward.1} parent=11 // pred_check
          %p298 = pneg %p168
        $region34: #{gcnet_forward.1} parent=11 // pred_check_branch
          %300 = sbr.rel (%p298) target = $region36
        $region35: #{gcnet_forward.1} parent=11 // pred_region
          _
        $region36: #{gcnet_forward.1} parent=11 // pred_fallthru
          _
        // Predicated region
        $region37: #{gcnet_forward.1} parent=11 // pred_check
          %p301 = pneg %p217
        $region38: #{gcnet_forward.1} parent=11 // pred_check_branch
          %303 = sbr.rel (%p301) target = $region40
        $region39: #{gcnet_forward.1} parent=11 // pred_region
          _
        $region40: #{gcnet_forward.1} parent=11 // pred_fallthru
          _
        // Predicated region
        $region41: #{gcnet_forward.1} parent=11 // pred_check
          %p304 = pneg %p238
        $region42: #{gcnet_forward.1} parent=11 // pred_check_branch
          %306 = sbr.rel (%p304) target = $region44
        $region43: #{gcnet_forward.1} parent=11 // pred_region
          _
        $region44: #{gcnet_forward.1} parent=11 // pred_fallthru
          _
      $region12: #{gcnet_forward.1} parent=5 // pred_fallthru
        _
      %p307 = scmp.lt.s32.totalorder %s16, 2
      // Predicated region
      $region45: #{gcnet_forward.1} parent=5 // pred_check
        %p308 = pneg %p307
      $region46: #{gcnet_forward.1} parent=5 // pred_check_branch
        %310 = sbr.rel (%p308) target = $region48
      $region47: #{gcnet_forward.1} parent=5 // pred_region
        // Predicated region
        $region49: #{gcnet_forward.1} parent=47 // pred_check
          %p311 = pneg %p190
        $region50: #{gcnet_forward.1} parent=47 // pred_check_branch
          %313 = sbr.rel (%p311) target = $region52
        $region51: #{gcnet_forward.1} parent=47 // pred_region
          %s314 = smul.u32 %s23, %s24
          %p315 = scmp.lt.s32.totalorder %s314, 0
          %s316 = scalar_select %p315, %s314, 0
          %s317 = smul.addr %s316, 2
          %s318 = scalar_lea.vmem %s6, %s317
          %s319 = smul.u32 %s23, %s24
        $region52: #{gcnet_forward.1} parent=47 // pred_fallthru
          _
      $region48: #{gcnet_forward.1} parent=5 // pred_fallthru
        _
      %p320 = scmp.le.s32.totalorder 1, %s16
      %p321 = scmp.lt.s32.totalorder %s16, 3
      %p322 = pnand %p320, %p321
      %p323 = pneg %p322
      // Predicated region
      $region53: #{gcnet_forward.1} parent=5 // pred_check
        _
      $region54: #{gcnet_forward.1} parent=5 // pred_check_branch
        %325 = sbr.rel (%p322) target = $region56
      $region55: #{gcnet_forward.1} parent=5 // pred_region
        %s326 = ssub.s32 %s16, 1
        %p327 = pneg %p56
        %p328 = pneg %p53
        %p329 = pneg %p77
        %p330 = pneg %p74
        %s331 = smul.u32 16, %s27
        %p332 = scmp.lt.s32.totalorder %s331, 15
        %s333 = scalar_select %p332, %s331, 15
        %p334 = scmp.lt.s32.totalorder %s28, 0
        %s335 = scalar_select %p334, %s28, 0
        %s336 = sadd.s32 %s335, %s333
        %s337 = smul.addr %s336, 4
        %s338 = scalar_lea.vmem %s2, %s337
        %p339 = pneg %p105
        %p340 = pneg %p102
        %p341 = pneg %p126
        %p342 = pneg %p123
        %p343 = pneg %p147
        %p344 = pneg %p144
        %p345 = pneg %p168
        %p346 = pneg %p165
        %s347 = smul.u32 %s26, %s27
        %p348 = scmp.lt.s32.totalorder %s347, 0
        %s349 = scalar_select %p348, %s347, 0
        %s350 = smul.addr %s349, 2
        %s351 = scalar_lea.vmem %s6, %s350
        %p352 = pneg %p196
        %p353 = pneg %p193
        %p354 = pneg %p217
        %p355 = pneg %p214
        %p356 = pneg %p238
        %p357 = pneg %p235
        %p358 = pneg %p259
        %p359 = pneg %p256
        %s360 = smul.u32 16, %s27
        %p361 = scmp.lt.s32.totalorder %s360, 15
        %s362 = scalar_select %p361, %s360, 15
        %p363 = scmp.lt.s32.totalorder %s28, 0
        %s364 = scalar_select %p363, %s28, 0
        %s365 = sadd.s32 %s364, %s362
        %s366 = smul.addr %s365, 4
        %s367 = scalar_lea.vmem %s2, %s366
        %s368 = smul.u32 16, %s27
        %s369 = smul.u32 %s26, %s27
        %p370 = scmp.lt.s32.totalorder %s369, 0
        %s371 = scalar_select %p370, %s369, 0
        %s372 = smul.addr %s371, 2
        %s373 = scalar_lea.vmem %s6, %s372
        %s374 = smul.u32 %s26, %s27
        %p375 = scmp.eq.s32.totalorder %s26, 0
        %p376 = scmp.eq.s32.totalorder %s27, 0
        %p377 = pnand %p375, %p376
        %p378 = pneg %p377
        %p379 = scmp.eq.s32.totalorder %s28, 0
        %p380 = pnand %p378, %p379
        %p381 = pneg %p380
        // Predicated region
        $region57: #{gcnet_forward.1} parent=55 // pred_check
          _
        $region58: #{gcnet_forward.1} parent=55 // pred_check_branch
          %383 = sbr.rel (%p380) target = $region60
        $region59: #{gcnet_forward.1} parent=55 // pred_region
          %384 = vst [vmem:[#allocation4] sm:$0x3] 0.0
        $region60: #{gcnet_forward.1} parent=55 // pred_fallthru
          _
        // Predicated region
        $region61: #{gcnet_forward.1} parent=55 // pred_check
          _
        $region62: #{gcnet_forward.1} parent=55 // pred_check_branch
          %386 = sbr.rel (%p377) target = $region64
        $region63: #{gcnet_forward.1} parent=55 // pred_region
          %s387 = smul.u32 %s28, 128
          %s388 = scalar_lea.vmem %s0, %s387
          %v389 = vld [vmem:[%s388] sm:$0xff]
          %v390 = vld [vmem:[%s388 + $0x8] sm:$0xff]
          %v391 = vld [vmem:[%s388 + $0x10] sm:$0xff]
          %v392 = vld [vmem:[%s388 + $0x18] sm:$0xff]
          %v393 = vld [vmem:[%s388 + $0x20] sm:$0xff]
          %v394 = vld [vmem:[%s388 + $0x28] sm:$0xff]
          %v395 = vld [vmem:[%s388 + $0x30] sm:$0xff]
          %v396 = vld [vmem:[%s388 + $0x38] sm:$0xff]
          %v397 = vld [vmem:[%s388 + $0x40] sm:$0xff]
          %v398 = vld [vmem:[%s388 + $0x48] sm:$0xff]
          %v399 = vld [vmem:[%s388 + $0x50] sm:$0xff]
          %v400 = vld [vmem:[%s388 + $0x58] sm:$0xff]
          %v401 = vld [vmem:[%s388 + $0x60] sm:$0xff]
          %v402 = vld [vmem:[%s388 + $0x68] sm:$0xff]
          %v403 = vld [vmem:[%s388 + $0x70] sm:$0xff]
          %v404 = vld [vmem:[%s388 + $0x78] sm:$0xff]
          %v405 = vld [vmem:[%s1] sm:$0xff]
          %v406 = vld [vmem:[%s1 + $0x8] sm:$0xff]
          %v407 = vld [vmem:[%s1 + $0x10] sm:$0xff]
          %v408 = vld [vmem:[%s1 + $0x18] sm:$0xff]
          %v409 = vld [vmem:[%s1 + $0x20] sm:$0xff]
          %v410 = vld [vmem:[%s1 + $0x28] sm:$0xff]
          %v411 = vld [vmem:[%s1 + $0x30] sm:$0xff]
          %v412 = vld [vmem:[%s1 + $0x38] sm:$0xff]
          %v413 = vld [vmem:[%s1 + $0x40] sm:$0xff]
          %v414 = vld [vmem:[%s1 + $0x48] sm:$0xff]
          %v415 = vld [vmem:[%s1 + $0x50] sm:$0xff]
          %v416 = vld [vmem:[%s1 + $0x58] sm:$0xff]
          %v417 = vld [vmem:[%s1 + $0x60] sm:$0xff]
          %v418 = vld [vmem:[%s1 + $0x68] sm:$0xff]
          %v419 = vld [vmem:[%s1 + $0x70] sm:$0xff]
          %v420 = vld [vmem:[%s1 + $0x78] sm:$0xff]
          %421 = vmatpush.msra.mxu0 %v420
          %422 = vmatpush.msra.mxu0 %v419
          %423 = vmatpush.msra.mxu0 %v418
          %424 = vmatpush.msra.mxu0 %v417
          %425 = vmatpush.msra.mxu0 %v416
          %426 = vmatpush.msra.mxu0 %v415
          %427 = vmatpush.msra.mxu0 %v414
          %428 = vmatpush.msra.mxu0 %v413
          %429 = vmatpush.msra.mxu0 %v412
          %430 = vmatpush.msra.mxu0 %v411
          %431 = vmatpush.msra.mxu0 %v410
          %432 = vmatpush.msra.mxu0 %v409
          %433 = vmatpush.msra.mxu0 %v408
          %434 = vmatpush.msra.mxu0 %v407
          %435 = vmatpush.msra.mxu0 %v406
          %436 = vmatpush.msra.mxu0 %v405
          %437 = vmatmul.f32.gmra.mxu0 %v389
          %v438 = vpop.f32.mrf.mxu0
          %v439 = vadd.f32 0.0, %v438
          %440 = vmatmul.f32.gmra.mxu0 %v390
          %v441 = vpop.f32.mrf.mxu0
          %v442 = vadd.f32 0.0, %v441
          %443 = vmatmul.f32.gmra.mxu0 %v391
          %v444 = vpop.f32.mrf.mxu0
          %v445 = vadd.f32 0.0, %v444
          %446 = vmatmul.f32.gmra.mxu0 %v392
          %v447 = vpop.f32.mrf.mxu0
          %v448 = vadd.f32 0.0, %v447
          %449 = vmatmul.f32.gmra.mxu0 %v393
          %v450 = vpop.f32.mrf.mxu0
          %v451 = vadd.f32 0.0, %v450
          %452 = vmatmul.f32.gmra.mxu0 %v394
          %v453 = vpop.f32.mrf.mxu0
          %v454 = vadd.f32 0.0, %v453
          %455 = vmatmul.f32.gmra.mxu0 %v395
          %v456 = vpop.f32.mrf.mxu0
          %v457 = vadd.f32 0.0, %v456
          %458 = vmatmul.f32.gmra.mxu0 %v396
          %v459 = vpop.f32.mrf.mxu0
          %v460 = vadd.f32 0.0, %v459
          %461 = vmatmul.f32.gmra.mxu0 %v397
          %v462 = vpop.f32.mrf.mxu0
          %v463 = vadd.f32 0.0, %v462
          %464 = vmatmul.f32.gmra.mxu0 %v398
          %v465 = vpop.f32.mrf.mxu0
          %v466 = vadd.f32 0.0, %v465
          %467 = vmatmul.f32.gmra.mxu0 %v399
          %v468 = vpop.f32.mrf.mxu0
          %v469 = vadd.f32 0.0, %v468
          %470 = vmatmul.f32.gmra.mxu0 %v400
          %v471 = vpop.f32.mrf.mxu0
          %v472 = vadd.f32 0.0, %v471
          %473 = vmatmul.f32.gmra.mxu0 %v401
          %v474 = vpop.f32.mrf.mxu0
          %v475 = vadd.f32 0.0, %v474
          %476 = vmatmul.f32.gmra.mxu0 %v402
          %v477 = vpop.f32.mrf.mxu0
          %v478 = vadd.f32 0.0, %v477
          %479 = vmatmul.f32.gmra.mxu0 %v403
          %v480 = vpop.f32.mrf.mxu0
          %v481 = vadd.f32 0.0, %v480
          %482 = vmatmul.f32.gmra.mxu0 %v404
          %v483 = vpop.f32.mrf.mxu0
          %v484 = vadd.f32 0.0, %v483
          %485 = vdwg.mxu0
          %v486 = vpack.c.bf16 %v439, %v439
          %v487 = vpack.c.bf16 %v442, %v442
          %v488 = vpack.c.bf16 %v445, %v445
          %v489 = vpack.c.bf16 %v448, %v448
          %v490 = vpack.c.bf16 %v451, %v451
          %v491 = vpack.c.bf16 %v454, %v454
          %v492 = vpack.c.bf16 %v457, %v457
          %v493 = vpack.c.bf16 %v460, %v460
          %v494 = vpack.c.bf16 %v463, %v463
          %v495 = vpack.c.bf16 %v466, %v466
          %v496 = vpack.c.bf16 %v469, %v469
          %v497 = vpack.c.bf16 %v472, %v472
          %v498 = vpack.c.bf16 %v475, %v475
          %v499 = vpack.c.bf16 %v478, %v478
          %v500 = vpack.c.bf16 %v481, %v481
          %v501 = vpack.c.bf16 %v484, %v484
          %s502 = smul.u32 %s28, 16
          %s503 = smul.addr %s502, 4
          %s504 = scalar_lea.vmem [#allocation2], %s503
          %505 = vst [vmem:[%s504] sm:$0xf] %v486
          %506 = vst [vmem:[%s504 + $0x4] sm:$0xf] %v487
          %507 = vst [vmem:[%s504 + $0x8] sm:$0xf] %v488
          %508 = vst [vmem:[%s504 + $0xc] sm:$0xf] %v489
          %509 = vst [vmem:[%s504 + $0x10] sm:$0xf] %v490
          %510 = vst [vmem:[%s504 + $0x14] sm:$0xf] %v491
          %511 = vst [vmem:[%s504 + $0x18] sm:$0xf] %v492
          %512 = vst [vmem:[%s504 + $0x1c] sm:$0xf] %v493
          %513 = vst [vmem:[%s504 + $0x20] sm:$0xf] %v494
          %514 = vst [vmem:[%s504 + $0x24] sm:$0xf] %v495
          %515 = vst [vmem:[%s504 + $0x28] sm:$0xf] %v496
          %516 = vst [vmem:[%s504 + $0x2c] sm:$0xf] %v497
          %517 = vst [vmem:[%s504 + $0x30] sm:$0xf] %v498
          %518 = vst [vmem:[%s504 + $0x34] sm:$0xf] %v499
          %519 = vst [vmem:[%s504 + $0x38] sm:$0xf] %v500
          %520 = vst [vmem:[%s504 + $0x3c] sm:$0xf] %v501
        $region64: #{gcnet_forward.1} parent=55 // pred_fallthru
          _
        // Predicated region
        $region65: #{gcnet_forward.1} parent=55 // pred_check
          %p521 = pneg %p379
        $region66: #{gcnet_forward.1} parent=55 // pred_check_branch
          %523 = sbr.rel (%p521) target = $region68
        $region67: #{gcnet_forward.1} parent=55 // pred_region
          %524 = vst [vmem:[#allocation3] sm:$0xff] 0.0
          %525 = vst [vmem:[#allocation3 + $0x8] sm:$0xff] 0.0
          %526 = vst [vmem:[#allocation3 + $0x10] sm:$0xff] 0.0
          %527 = vst [vmem:[#allocation3 + $0x18] sm:$0xff] 0.0
          %528 = vst [vmem:[#allocation3 + $0x20] sm:$0xff] 0.0
          %529 = vst [vmem:[#allocation3 + $0x28] sm:$0xff] 0.0
          %530 = vst [vmem:[#allocation3 + $0x30] sm:$0xff] 0.0
          %531 = vst [vmem:[#allocation3 + $0x38] sm:$0xff] 0.0
          %532 = vst [vmem:[#allocation3 + $0x40] sm:$0xff] 0.0
          %533 = vst [vmem:[#allocation3 + $0x48] sm:$0xff] 0.0
          %534 = vst [vmem:[#allocation3 + $0x50] sm:$0xff] 0.0
          %535 = vst [vmem:[#allocation3 + $0x58] sm:$0xff] 0.0
          %536 = vst [vmem:[#allocation3 + $0x60] sm:$0xff] 0.0
          %537 = vst [vmem:[#allocation3 + $0x68] sm:$0xff] 0.0
          %538 = vst [vmem:[#allocation3 + $0x70] sm:$0xff] 0.0
          %539 = vst [vmem:[#allocation3 + $0x78] sm:$0xff] 0.0
        $region68: #{gcnet_forward.1} parent=55 // pred_fallthru
          _
        %v540 = vld [vmem:[#allocation3] sm:$0xff]
        %v541 = vld [vmem:[#allocation3 + $0x8] sm:$0xff]
        %v542 = vld [vmem:[#allocation3 + $0x10] sm:$0xff]
        %v543 = vld [vmem:[#allocation3 + $0x18] sm:$0xff]
        %v544 = vld [vmem:[#allocation3 + $0x20] sm:$0xff]
        %v545 = vld [vmem:[#allocation3 + $0x28] sm:$0xff]
        %v546 = vld [vmem:[#allocation3 + $0x30] sm:$0xff]
        %v547 = vld [vmem:[#allocation3 + $0x38] sm:$0xff]
        %v548 = vld [vmem:[#allocation3 + $0x40] sm:$0xff]
        %v549 = vld [vmem:[#allocation3 + $0x48] sm:$0xff]
        %v550 = vld [vmem:[#allocation3 + $0x50] sm:$0xff]
        %v551 = vld [vmem:[#allocation3 + $0x58] sm:$0xff]
        %v552 = vld [vmem:[#allocation3 + $0x60] sm:$0xff]
        %v553 = vld [vmem:[#allocation3 + $0x68] sm:$0xff]
        %v554 = vld [vmem:[#allocation3 + $0x70] sm:$0xff]
        %v555 = vld [vmem:[#allocation3 + $0x78] sm:$0xff]
        %v556 = vld [vmem:[%s367] sm:$0xf]
        %v557 = vld [vmem:[%s367 + $0x4] sm:$0xf]
        %v558 = vld [vmem:[%s367 + $0x8] sm:$0xf]
        %v559 = vld [vmem:[%s367 + $0xc] sm:$0xf]
        %v560 = vld [vmem:[%s367 + $0x10] sm:$0xf]
        %v561 = vld [vmem:[%s367 + $0x14] sm:$0xf]
        %v562 = vld [vmem:[%s367 + $0x18] sm:$0xf]
        %v563 = vld [vmem:[%s367 + $0x1c] sm:$0xf]
        %v564 = vld [vmem:[%s367 + $0x20] sm:$0xf]
        %v565 = vld [vmem:[%s367 + $0x24] sm:$0xf]
        %v566 = vld [vmem:[%s367 + $0x28] sm:$0xf]
        %v567 = vld [vmem:[%s367 + $0x2c] sm:$0xf]
        %v568 = vld [vmem:[%s367 + $0x30] sm:$0xf]
        %v569 = vld [vmem:[%s367 + $0x34] sm:$0xf]
        %v570 = vld [vmem:[%s367 + $0x38] sm:$0xf]
        %v571 = vld [vmem:[%s367 + $0x3c] sm:$0xf]
        %s572 = sadd.s32 %s26, %s28
        %s573 = smul.u32 %s572, 16
        %s574 = smul.addr %s573, 4
        %s575 = scalar_lea.vmem [#allocation2], %s574
        %v576 = vld [vmem:[%s575] sm:$0xf]
        %v577 = vld [vmem:[%s575 + $0x4] sm:$0xf]
        %v578 = vld [vmem:[%s575 + $0x8] sm:$0xf]
        %v579 = vld [vmem:[%s575 + $0xc] sm:$0xf]
        %v580 = vld [vmem:[%s575 + $0x10] sm:$0xf]
        %v581 = vld [vmem:[%s575 + $0x14] sm:$0xf]
        %v582 = vld [vmem:[%s575 + $0x18] sm:$0xf]
        %v583 = vld [vmem:[%s575 + $0x1c] sm:$0xf]
        %v584 = vld [vmem:[%s575 + $0x20] sm:$0xf]
        %v585 = vld [vmem:[%s575 + $0x24] sm:$0xf]
        %v586 = vld [vmem:[%s575 + $0x28] sm:$0xf]
        %v587 = vld [vmem:[%s575 + $0x2c] sm:$0xf]
        %v588 = vld [vmem:[%s575 + $0x30] sm:$0xf]
        %v589 = vld [vmem:[%s575 + $0x34] sm:$0xf]
        %v590 = vld [vmem:[%s575 + $0x38] sm:$0xf]
        %v591 = vld [vmem:[%s575 + $0x3c] sm:$0xf]
        %v608 = vunpack.c.l.b16 %v556
        %v609 = vunpack.c.l.b16 %v557
        %v610 = vunpack.c.l.b16 %v558
        %v611 = vunpack.c.l.b16 %v559
        %v612 = vunpack.c.l.b16 %v560
        %v613 = vunpack.c.l.b16 %v561
        %v614 = vunpack.c.l.b16 %v562
        %v615 = vunpack.c.l.b16 %v563
        %v616 = vunpack.c.l.b16 %v564
        %v617 = vunpack.c.l.b16 %v565
        %v618 = vunpack.c.l.b16 %v566
        %v619 = vunpack.c.l.b16 %v567
        %v620 = vunpack.c.l.b16 %v568
        %v621 = vunpack.c.l.b16 %v569
        %v622 = vunpack.c.l.b16 %v570
        %v623 = vunpack.c.l.b16 %v571
        %v624 = vpack.c.b16 %v609, %v608
        %v625 = vpack.c.b16 %v611, %v610
        %v626 = vpack.c.b16 %v613, %v612
        %v627 = vpack.c.b16 %v615, %v614
        %v628 = vpack.c.b16 %v617, %v616
        %v629 = vpack.c.b16 %v619, %v618
        %v630 = vpack.c.b16 %v621, %v620
        %v631 = vpack.c.b16 %v623, %v622
        %v656 = vunpack.c.l.b16 %v576
        %v657 = vunpack.c.l.b16 %v577
        %v658 = vunpack.c.l.b16 %v578
        %v659 = vunpack.c.l.b16 %v579
        %v660 = vunpack.c.l.b16 %v580
        %v661 = vunpack.c.l.b16 %v581
        %v662 = vunpack.c.l.b16 %v582
        %v663 = vunpack.c.l.b16 %v583
        %v664 = vunpack.c.l.b16 %v584
        %v665 = vunpack.c.l.b16 %v585
        %v666 = vunpack.c.l.b16 %v586
        %v667 = vunpack.c.l.b16 %v587
        %v668 = vunpack.c.l.b16 %v588
        %v669 = vunpack.c.l.b16 %v589
        %v670 = vunpack.c.l.b16 %v590
        %v671 = vunpack.c.l.b16 %v591
        %v672 = vpack.c.b16 %v657, %v656
        %v673 = vpack.c.b16 %v659, %v658
        %v674 = vpack.c.b16 %v661, %v660
        %v675 = vpack.c.b16 %v663, %v662
        %v676 = vpack.c.b16 %v665, %v664
        %v677 = vpack.c.b16 %v667, %v666
        %v678 = vpack.c.b16 %v669, %v668
        %v679 = vpack.c.b16 %v671, %v670
        %688 = vmatpush.bf16.msra.mxu0 %v679
        %689 = vmatpush.bf16.msra.mxu0 %v678
        %690 = vmatpush.bf16.msra.mxu0 %v677
        %691 = vmatpush.bf16.msra.mxu0 %v676
        %692 = vmatpush.bf16.msra.mxu0 %v675
        %693 = vmatpush.bf16.msra.mxu0 %v674
        %694 = vmatpush.bf16.msra.mxu0 %v673
        %695 = vmatpush.bf16.msra.mxu0 %v672
        %696 = vmatmul.bf16.gmra.mxu0 %v624
        %v697 = vpop.f32.mrf.mxu0
        %v698 = vadd.f32 0.0, %v697
        %v699 = vpop.f32.mrf.mxu0
        %v700 = vadd.f32 0.0, %v699
        %701 = vmatmul.bf16.gmra.mxu0 %v625
        %v702 = vpop.f32.mrf.mxu0
        %v703 = vadd.f32 0.0, %v702
        %v704 = vpop.f32.mrf.mxu0
        %v705 = vadd.f32 0.0, %v704
        %706 = vmatmul.bf16.gmra.mxu0 %v626
        %v707 = vpop.f32.mrf.mxu0
        %v708 = vadd.f32 0.0, %v707
        %v709 = vpop.f32.mrf.mxu0
        %v710 = vadd.f32 0.0, %v709
        %711 = vmatmul.bf16.gmra.mxu0 %v627
        %v712 = vpop.f32.mrf.mxu0
        %v713 = vadd.f32 0.0, %v712
        %v714 = vpop.f32.mrf.mxu0
        %v715 = vadd.f32 0.0, %v714
        %716 = vmatmul.bf16.gmra.mxu0 %v628
        %v717 = vpop.f32.mrf.mxu0
        %v718 = vadd.f32 0.0, %v717
        %v719 = vpop.f32.mrf.mxu0
        %v720 = vadd.f32 0.0, %v719
        %721 = vmatmul.bf16.gmra.mxu0 %v629
        %v722 = vpop.f32.mrf.mxu0
        %v723 = vadd.f32 0.0, %v722
        %v724 = vpop.f32.mrf.mxu0
        %v725 = vadd.f32 0.0, %v724
        %726 = vmatmul.bf16.gmra.mxu0 %v630
        %v727 = vpop.f32.mrf.mxu0
        %v728 = vadd.f32 0.0, %v727
        %v729 = vpop.f32.mrf.mxu0
        %v730 = vadd.f32 0.0, %v729
        %731 = vmatmul.bf16.gmra.mxu0 %v631
        %v732 = vpop.f32.mrf.mxu0
        %v733 = vadd.f32 0.0, %v732
        %v734 = vpop.f32.mrf.mxu0
        %v735 = vadd.f32 0.0, %v734
        %736 = vdwg.mxu0
        %v737 = vadd.f32 %v540, %v698
        %v738 = vadd.f32 %v541, %v700
        %v739 = vadd.f32 %v542, %v703
        %v740 = vadd.f32 %v543, %v705
        %v741 = vadd.f32 %v544, %v708
        %v742 = vadd.f32 %v545, %v710
        %v743 = vadd.f32 %v546, %v713
        %v744 = vadd.f32 %v547, %v715
        %v745 = vadd.f32 %v548, %v718
        %v746 = vadd.f32 %v549, %v720
        %v747 = vadd.f32 %v550, %v723
        %v748 = vadd.f32 %v551, %v725
        %v749 = vadd.f32 %v552, %v728
        %v750 = vadd.f32 %v553, %v730
        %v751 = vadd.f32 %v554, %v733
        %v752 = vadd.f32 %v555, %v735
        %753 = vst [vmem:[#allocation3] sm:$0xff] %v737
        %754 = vst [vmem:[#allocation3 + $0x8] sm:$0xff] %v738
        %755 = vst [vmem:[#allocation3 + $0x10] sm:$0xff] %v739
        %756 = vst [vmem:[#allocation3 + $0x18] sm:$0xff] %v740
        %757 = vst [vmem:[#allocation3 + $0x20] sm:$0xff] %v741
        %758 = vst [vmem:[#allocation3 + $0x28] sm:$0xff] %v742
        %759 = vst [vmem:[#allocation3 + $0x30] sm:$0xff] %v743
        %760 = vst [vmem:[#allocation3 + $0x38] sm:$0xff] %v744
        %761 = vst [vmem:[#allocation3 + $0x40] sm:$0xff] %v745
        %762 = vst [vmem:[#allocation3 + $0x48] sm:$0xff] %v746
        %763 = vst [vmem:[#allocation3 + $0x50] sm:$0xff] %v747
        %764 = vst [vmem:[#allocation3 + $0x58] sm:$0xff] %v748
        %765 = vst [vmem:[#allocation3 + $0x60] sm:$0xff] %v749
        %766 = vst [vmem:[#allocation3 + $0x68] sm:$0xff] %v750
        %767 = vst [vmem:[#allocation3 + $0x70] sm:$0xff] %v751
        %768 = vst [vmem:[#allocation3 + $0x78] sm:$0xff] %v752
        // Predicated region
        $region69: #{gcnet_forward.1} parent=55 // pred_check
          %p769 = pneg %p379
        $region70: #{gcnet_forward.1} parent=55 // pred_check_branch
          %771 = sbr.rel (%p769) target = $region72
        $region71: #{gcnet_forward.1} parent=55 // pred_region
          // Predicated region
          $region73: #{gcnet_forward.1} parent=71 // pred_check
            %p772 = pneg %p375
          $region74: #{gcnet_forward.1} parent=71 // pred_check_branch
            %774 = sbr.rel (%p772) target = $region76
          $region75: #{gcnet_forward.1} parent=71 // pred_region
            %v775 = vld [vmem:[#allocation3] sm:$0xff]
            %v776 = vld [vmem:[#allocation3 + $0x8] sm:$0xff]
            %v777 = vld [vmem:[#allocation3 + $0x10] sm:$0xff]
            %v778 = vld [vmem:[#allocation3 + $0x18] sm:$0xff]
            %v779 = vld [vmem:[#allocation3 + $0x20] sm:$0xff]
            %v780 = vld [vmem:[#allocation3 + $0x28] sm:$0xff]
            %v781 = vld [vmem:[#allocation3 + $0x30] sm:$0xff]
            %v782 = vld [vmem:[#allocation3 + $0x38] sm:$0xff]
            %v783 = vld [vmem:[#allocation3 + $0x40] sm:$0xff]
            %v784 = vld [vmem:[#allocation3 + $0x48] sm:$0xff]
            %v785 = vld [vmem:[#allocation3 + $0x50] sm:$0xff]
            %v786 = vld [vmem:[#allocation3 + $0x58] sm:$0xff]
            %v787 = vld [vmem:[#allocation3 + $0x60] sm:$0xff]
            %v788 = vld [vmem:[#allocation3 + $0x68] sm:$0xff]
            %v789 = vld [vmem:[#allocation3 + $0x70] sm:$0xff]
            %v790 = vld [vmem:[#allocation3 + $0x78] sm:$0xff]
            %v791 = vld [vmem:[%s4] sm:$0x1]
            %v793 = vperm.slane %v791, 0
            %v795 = vadd.f32 %v775, %v793
            %v796 = vadd.f32 %v776, %v793
            %v797 = vadd.f32 %v777, %v793
            %v798 = vadd.f32 %v778, %v793
            %v799 = vadd.f32 %v779, %v793
            %v800 = vadd.f32 %v780, %v793
            %v801 = vadd.f32 %v781, %v793
            %v802 = vadd.f32 %v782, %v793
            %v803 = vadd.f32 %v783, %v793
            %v804 = vadd.f32 %v784, %v793
            %v805 = vadd.f32 %v785, %v793
            %v806 = vadd.f32 %v786, %v793
            %v807 = vadd.f32 %v787, %v793
            %v808 = vadd.f32 %v788, %v793
            %v809 = vadd.f32 %v789, %v793
            %v810 = vadd.f32 %v790, %v793
            %v811 = vmax.f32 %v795, 0.0
            %v812 = vmax.f32 %v796, 0.0
            %v813 = vmax.f32 %v797, 0.0
            %v814 = vmax.f32 %v798, 0.0
            %v815 = vmax.f32 %v799, 0.0
            %v816 = vmax.f32 %v800, 0.0
            %v817 = vmax.f32 %v801, 0.0
            %v818 = vmax.f32 %v802, 0.0
            %v819 = vmax.f32 %v803, 0.0
            %v820 = vmax.f32 %v804, 0.0
            %v821 = vmax.f32 %v805, 0.0
            %v822 = vmax.f32 %v806, 0.0
            %v823 = vmax.f32 %v807, 0.0
            %v824 = vmax.f32 %v808, 0.0
            %v825 = vmax.f32 %v809, 0.0
            %v826 = vmax.f32 %v810, 0.0
            %v827 = vld [vmem:[%s3] sm:$0xff]
            %v828 = vld [vmem:[%s3 + $0x8] sm:$0xff]
            %v829 = vld [vmem:[%s3 + $0x10] sm:$0xff]
            %v830 = vld [vmem:[%s3 + $0x18] sm:$0xff]
            %v831 = vld [vmem:[%s3 + $0x20] sm:$0xff]
            %v832 = vld [vmem:[%s3 + $0x28] sm:$0xff]
            %v833 = vld [vmem:[%s3 + $0x30] sm:$0xff]
            %v834 = vld [vmem:[%s3 + $0x38] sm:$0xff]
            %v835 = vld [vmem:[%s3 + $0x40] sm:$0xff]
            %v836 = vld [vmem:[%s3 + $0x48] sm:$0xff]
            %v837 = vld [vmem:[%s3 + $0x50] sm:$0xff]
            %v838 = vld [vmem:[%s3 + $0x58] sm:$0xff]
            %v839 = vld [vmem:[%s3 + $0x60] sm:$0xff]
            %v840 = vld [vmem:[%s3 + $0x68] sm:$0xff]
            %v841 = vld [vmem:[%s3 + $0x70] sm:$0xff]
            %v842 = vld [vmem:[%s3 + $0x78] sm:$0xff]
            %843 = vmatpush.msra.mxu0 %v842
            %844 = vmatpush.msra.mxu0 %v841
            %845 = vmatpush.msra.mxu0 %v840
            %846 = vmatpush.msra.mxu0 %v839
            %847 = vmatpush.msra.mxu0 %v838
            %848 = vmatpush.msra.mxu0 %v837
            %849 = vmatpush.msra.mxu0 %v836
            %850 = vmatpush.msra.mxu0 %v835
            %851 = vmatpush.msra.mxu0 %v834
            %852 = vmatpush.msra.mxu0 %v833
            %853 = vmatpush.msra.mxu0 %v832
            %854 = vmatpush.msra.mxu0 %v831
            %855 = vmatpush.msra.mxu0 %v830
            %856 = vmatpush.msra.mxu0 %v829
            %857 = vmatpush.msra.mxu0 %v828
            %858 = vmatpush.msra.mxu0 %v827
            %859 = vmatmul.f32.gmra.mxu0 %v811
            %v860 = vpop.f32.mrf.mxu0
            %v861 = vadd.f32 0.0, %v860
            %862 = vmatmul.f32.gmra.mxu0 %v812
            %v863 = vpop.f32.mrf.mxu0
            %v864 = vadd.f32 0.0, %v863
            %865 = vmatmul.f32.gmra.mxu0 %v813
            %v866 = vpop.f32.mrf.mxu0
            %v867 = vadd.f32 0.0, %v866
            %868 = vmatmul.f32.gmra.mxu0 %v814
            %v869 = vpop.f32.mrf.mxu0
            %v870 = vadd.f32 0.0, %v869
            %871 = vmatmul.f32.gmra.mxu0 %v815
            %v872 = vpop.f32.mrf.mxu0
            %v873 = vadd.f32 0.0, %v872
            %874 = vmatmul.f32.gmra.mxu0 %v816
            %v875 = vpop.f32.mrf.mxu0
            %v876 = vadd.f32 0.0, %v875
            %877 = vmatmul.f32.gmra.mxu0 %v817
            %v878 = vpop.f32.mrf.mxu0
            %v879 = vadd.f32 0.0, %v878
            %880 = vmatmul.f32.gmra.mxu0 %v818
            %v881 = vpop.f32.mrf.mxu0
            %v882 = vadd.f32 0.0, %v881
            %883 = vmatmul.f32.gmra.mxu0 %v819
            %v884 = vpop.f32.mrf.mxu0
            %v885 = vadd.f32 0.0, %v884
            %886 = vmatmul.f32.gmra.mxu0 %v820
            %v887 = vpop.f32.mrf.mxu0
            %v888 = vadd.f32 0.0, %v887
            %889 = vmatmul.f32.gmra.mxu0 %v821
            %v890 = vpop.f32.mrf.mxu0
            %v891 = vadd.f32 0.0, %v890
            %892 = vmatmul.f32.gmra.mxu0 %v822
            %v893 = vpop.f32.mrf.mxu0
            %v894 = vadd.f32 0.0, %v893
            %895 = vmatmul.f32.gmra.mxu0 %v823
            %v896 = vpop.f32.mrf.mxu0
            %v897 = vadd.f32 0.0, %v896
            %898 = vmatmul.f32.gmra.mxu0 %v824
            %v899 = vpop.f32.mrf.mxu0
            %v900 = vadd.f32 0.0, %v899
            %901 = vmatmul.f32.gmra.mxu0 %v825
            %v902 = vpop.f32.mrf.mxu0
            %v903 = vadd.f32 0.0, %v902
            %904 = vmatmul.f32.gmra.mxu0 %v826
            %v905 = vpop.f32.mrf.mxu0
            %v906 = vadd.f32 0.0, %v905
            %907 = vdwg.mxu0
            %v908 = vpack.c.bf16 %v861, %v861
            %v909 = vpack.c.bf16 %v864, %v864
            %v910 = vpack.c.bf16 %v867, %v867
            %v911 = vpack.c.bf16 %v870, %v870
            %v912 = vpack.c.bf16 %v873, %v873
            %v913 = vpack.c.bf16 %v876, %v876
            %v914 = vpack.c.bf16 %v879, %v879
            %v915 = vpack.c.bf16 %v882, %v882
            %v916 = vpack.c.bf16 %v885, %v885
            %v917 = vpack.c.bf16 %v888, %v888
            %v918 = vpack.c.bf16 %v891, %v891
            %v919 = vpack.c.bf16 %v894, %v894
            %v920 = vpack.c.bf16 %v897, %v897
            %v921 = vpack.c.bf16 %v900, %v900
            %v922 = vpack.c.bf16 %v903, %v903
            %v923 = vpack.c.bf16 %v906, %v906
            %s924 = sadd.s32 %s27, 1
            %s925 = smul.u32 %s924, 16
            %s926 = smul.addr %s925, 4
            %s927 = scalar_lea.vmem [#allocation2], %s926
            %928 = vst [vmem:[%s927] sm:$0xf] %v908
            %929 = vst [vmem:[%s927 + $0x4] sm:$0xf] %v909
            %930 = vst [vmem:[%s927 + $0x8] sm:$0xf] %v910
            %931 = vst [vmem:[%s927 + $0xc] sm:$0xf] %v911
            %932 = vst [vmem:[%s927 + $0x10] sm:$0xf] %v912
            %933 = vst [vmem:[%s927 + $0x14] sm:$0xf] %v913
            %934 = vst [vmem:[%s927 + $0x18] sm:$0xf] %v914
            %935 = vst [vmem:[%s927 + $0x1c] sm:$0xf] %v915
            %936 = vst [vmem:[%s927 + $0x20] sm:$0xf] %v916
            %937 = vst [vmem:[%s927 + $0x24] sm:$0xf] %v917
            %938 = vst [vmem:[%s927 + $0x28] sm:$0xf] %v918
            %939 = vst [vmem:[%s927 + $0x2c] sm:$0xf] %v919
            %940 = vst [vmem:[%s927 + $0x30] sm:$0xf] %v920
            %941 = vst [vmem:[%s927 + $0x34] sm:$0xf] %v921
            %942 = vst [vmem:[%s927 + $0x38] sm:$0xf] %v922
            %943 = vst [vmem:[%s927 + $0x3c] sm:$0xf] %v923
          $region76: #{gcnet_forward.1} parent=71 // pred_fallthru
            _
          %p944 = scmp.eq.s32.totalorder %s26, 1
          // Predicated region
          $region77: #{gcnet_forward.1} parent=71 // pred_check
            %p945 = pneg %p944
          $region78: #{gcnet_forward.1} parent=71 // pred_check_branch
            %947 = sbr.rel (%p945) target = $region80
          $region79: #{gcnet_forward.1} parent=71 // pred_region
            %v948 = vld [vmem:[#allocation3] sm:$0xff]
            %v949 = vld [vmem:[#allocation3 + $0x8] sm:$0xff]
            %v950 = vld [vmem:[#allocation3 + $0x10] sm:$0xff]
            %v951 = vld [vmem:[#allocation3 + $0x18] sm:$0xff]
            %v952 = vld [vmem:[#allocation3 + $0x20] sm:$0xff]
            %v953 = vld [vmem:[#allocation3 + $0x28] sm:$0xff]
            %v954 = vld [vmem:[#allocation3 + $0x30] sm:$0xff]
            %v955 = vld [vmem:[#allocation3 + $0x38] sm:$0xff]
            %v956 = vld [vmem:[#allocation3 + $0x40] sm:$0xff]
            %v957 = vld [vmem:[#allocation3 + $0x48] sm:$0xff]
            %v958 = vld [vmem:[#allocation3 + $0x50] sm:$0xff]
            %v959 = vld [vmem:[#allocation3 + $0x58] sm:$0xff]
            %v960 = vld [vmem:[#allocation3 + $0x60] sm:$0xff]
            %v961 = vld [vmem:[#allocation3 + $0x68] sm:$0xff]
            %v962 = vld [vmem:[#allocation3 + $0x70] sm:$0xff]
            %v963 = vld [vmem:[#allocation3 + $0x78] sm:$0xff]
            %v964 = vld [vmem:[%s5] sm:$0x1]
            %v966 = vperm.slane %v964, 0
            %v968 = vadd.f32 %v948, %v966
            %v969 = vadd.f32 %v949, %v966
            %v970 = vadd.f32 %v950, %v966
            %v971 = vadd.f32 %v951, %v966
            %v972 = vadd.f32 %v952, %v966
            %v973 = vadd.f32 %v953, %v966
            %v974 = vadd.f32 %v954, %v966
            %v975 = vadd.f32 %v955, %v966
            %v976 = vadd.f32 %v956, %v966
            %v977 = vadd.f32 %v957, %v966
            %v978 = vadd.f32 %v958, %v966
            %v979 = vadd.f32 %v959, %v966
            %v980 = vadd.f32 %v960, %v966
            %v981 = vadd.f32 %v961, %v966
            %v982 = vadd.f32 %v962, %v966
            %v983 = vadd.f32 %v963, %v966
            %v984 = vmax.f32 %v968, 0.0
            %v985 = vmax.f32 %v969, 0.0
            %v986 = vmax.f32 %v970, 0.0
            %v987 = vmax.f32 %v971, 0.0
            %v988 = vmax.f32 %v972, 0.0
            %v989 = vmax.f32 %v973, 0.0
            %v990 = vmax.f32 %v974, 0.0
            %v991 = vmax.f32 %v975, 0.0
            %v992 = vmax.f32 %v976, 0.0
            %v993 = vmax.f32 %v977, 0.0
            %v994 = vmax.f32 %v978, 0.0
            %v995 = vmax.f32 %v979, 0.0
            %v996 = vmax.f32 %v980, 0.0
            %v997 = vmax.f32 %v981, 0.0
            %v998 = vmax.f32 %v982, 0.0
            %v999 = vmax.f32 %v983, 0.0
            %v1000 = vld [vmem:[#allocation4] sm:$0x3]
            %v1001 = vld [vmem:[%s373] sm:$0x3]
            %1002 = vmatpush.msra.mxu0 %v999
            %1003 = vmatpush.msra.mxu0 %v998
            %1004 = vmatpush.msra.mxu0 %v997
            %1005 = vmatpush.msra.mxu0 %v996
            %1006 = vmatpush.msra.mxu0 %v995
            %1007 = vmatpush.msra.mxu0 %v994
            %1008 = vmatpush.msra.mxu0 %v993
            %1009 = vmatpush.msra.mxu0 %v992
            %1010 = vmatpush.msra.mxu0 %v991
            %1011 = vmatpush.msra.mxu0 %v990
            %1012 = vmatpush.msra.mxu0 %v989
            %1013 = vmatpush.msra.mxu0 %v988
            %1014 = vmatpush.msra.mxu0 %v987
            %1015 = vmatpush.msra.mxu0 %v986
            %1016 = vmatpush.msra.mxu0 %v985
            %1017 = vmatpush.msra.mxu0 %v984
            %1018 = vmatmul.f32.gmra.mxu0 %v1001
            %v1019 = vpop.f32.mrf.mxu0
            %v1020 = vadd.f32 0.0, %v1019
            %1021 = vdwg.mxu0
            %v1022 = vadd.f32 %v1000, %v1020
            %1023 = vst [vmem:[#allocation4] sm:$0x3] %v1022
            // Predicated region
            $region81: #{gcnet_forward.1} parent=79 // pred_check
              %p1024 = pneg %p376
            $region82: #{gcnet_forward.1} parent=79 // pred_check_branch
              %1026 = sbr.rel (%p1024) target = $region84
            $region83: #{gcnet_forward.1} parent=79 // pred_region
              %v1027 = vld [vmem:[#allocation4] sm:$0x3]
              %v1028 = vld [vmem:[%s7] sm:$0xff]
              %v1029 = vld [vmem:[%s7 + $0x8] sm:$0xff]
              %v1030 = vld [vmem:[%s7 + $0x10] sm:$0xff]
              %v1031 = vld [vmem:[%s7 + $0x18] sm:$0xff]
              %v1032 = vld [vmem:[%s7 + $0x20] sm:$0xff]
              %v1033 = vld [vmem:[%s7 + $0x28] sm:$0xff]
              %v1034 = vld [vmem:[%s7 + $0x30] sm:$0xff]
              %v1035 = vld [vmem:[%s7 + $0x38] sm:$0xff]
              %v1036 = vld [vmem:[%s7 + $0x40] sm:$0xff]
              %v1037 = vld [vmem:[%s7 + $0x48] sm:$0xff]
              %v1038 = vld [vmem:[%s7 + $0x50] sm:$0xff]
              %v1039 = vld [vmem:[%s7 + $0x58] sm:$0xff]
              %v1040 = vld [vmem:[%s7 + $0x60] sm:$0xff]
              %v1041 = vld [vmem:[%s7 + $0x68] sm:$0xff]
              %v1042 = vld [vmem:[%s7 + $0x70] sm:$0xff]
              %v1043 = vld [vmem:[%s7 + $0x78] sm:$0xff]
              %v1044 = vld [vmem:[%s8] sm:$0x1]
              %v1046 = vperm.slane %v1044, 0
              %1048 = vmatpush.msra.mxu0 %v1043
              %1049 = vmatpush.msra.mxu0 %v1042
              %1050 = vmatpush.msra.mxu0 %v1041
              %1051 = vmatpush.msra.mxu0 %v1040
              %1052 = vmatpush.msra.mxu0 %v1039
              %1053 = vmatpush.msra.mxu0 %v1038
              %1054 = vmatpush.msra.mxu0 %v1037
              %1055 = vmatpush.msra.mxu0 %v1036
              %1056 = vmatpush.msra.mxu0 %v1035
              %1057 = vmatpush.msra.mxu0 %v1034
              %1058 = vmatpush.msra.mxu0 %v1033
              %1059 = vmatpush.msra.mxu0 %v1032
              %1060 = vmatpush.msra.mxu0 %v1031
              %1061 = vmatpush.msra.mxu0 %v1030
              %1062 = vmatpush.msra.mxu0 %v1029
              %1063 = vmatpush.msra.mxu0 %v1028
              %1064 = vmatmul.f32.gmra.mxu0 %v1027
              %v1065 = vpop.f32.mrf.mxu0
              %v1066 = vadd.f32 %v1046, %v1065
              %1067 = vdwg.mxu0
              %vm1068 = vcmask 1041408
              %v1069 = vsel %vm1068, %v1066, -inf
              %1070 = vmax.xlane.f32.xlu0 %v1069
              %v1071 = vpop.xlane.xlu0 %1070
              %v1072 = vsub.f32 %v1066, %v1071
              %v1073 = vmul.f32 %v1072, 1.442695
              %v1074 = vpow.pop %v1073
              %v1075 = vsel %vm1068, %v1074, 0.0
              %1076 = vadd.xlane.f32.xlu0 %v1075
              %v1077 = vpop.xlane.xlu0 %1076
              %v1078 = vlog2.pop %v1077
              %v1079 = vmul.f32 %v1078, 0.6931472
              %v1080 = vsub.f32 %v1072, %v1079
              %1081 = vst [vmem:[#allocation5] sm:$0x3] %v1080
            $region84: #{gcnet_forward.1} parent=79 // pred_fallthru
              _
          $region80: #{gcnet_forward.1} parent=71 // pred_fallthru
            _
        $region72: #{gcnet_forward.1} parent=55 // pred_fallthru
          _
        // Predicated region
        $region85: #{gcnet_forward.1} parent=55 // pred_check
          %p1082 = pneg %p256
        $region86: #{gcnet_forward.1} parent=55 // pred_check_branch
          %1084 = sbr.rel (%p1082) target = $region88
        $region87: #{gcnet_forward.1} parent=55 // pred_region
          %1086 = vsyncadd [#allocation6], 0
          %s1088 = sshll.u32 [#allocation5], 4
          %s1089 = int_to_ptr.vmem [resolvable:$true] %s1088
          %s1090 = sshll.u32 %s9, 4
          %s1091 = int_to_ptr.hbm [resolvable:$true] %s1090
          %1093 = dma.vmem_to_hbm [thread:$0]  %s1089, 32, %s1091, [#allocation6]
        $region88: #{gcnet_forward.1} parent=55 // pred_fallthru
          _
        // Predicated region
        $region89: #{gcnet_forward.1} parent=55 // pred_check
          %p1094 = pneg %p256
        $region90: #{gcnet_forward.1} parent=55 // pred_check_branch
          %1096 = sbr.rel (%p1094) target = $region92
        $region91: #{gcnet_forward.1} parent=55 // pred_region
          %1098 = dma.done [#allocation6], 32
        $region92: #{gcnet_forward.1} parent=55 // pred_fallthru
          _
      $region56: #{gcnet_forward.1} parent=5 // pred_fallthru
        _
      %p1099 = scmp.le.s32.totalorder 2, %s16
      // Predicated region
      $region93: #{gcnet_forward.1} parent=5 // pred_check
        %p1100 = pneg %p1099
      $region94: #{gcnet_forward.1} parent=5 // pred_check_branch
        %1102 = sbr.rel (%p1100) target = $region96
      $region95: #{gcnet_forward.1} parent=5 // pred_region
        %s1103 = ssub.s32 %s16, 2
      $region96: #{gcnet_forward.1} parent=5 // pred_fallthru
        _
    $region6: #{gcnet_forward.1} parent=1 // loop_footer
      %s20 = sadd.s32 1, %s16
    $region7: #{gcnet_forward.1} parent=1 // loop_footer_branch
      %15 = sbr.rel target = $region3
    $region8: #{gcnet_forward.1} parent=1 // loop_exit
      _
    %1104 = vsyncpa [#allocation6], 1
    %s1105 = scalar_lea.sflag [#allocation6], 1
    %1106 = vsyncpa %s1105, 1

</llo_original>
